<compile_context>
chip_gen: v7x
topology: tpu7x:2x2x1
jax: 0.10.0
libtpu: 0.0.40
codegen_flags: <defaults>
</compile_context>

<pallas_src>
import jax
import jax.numpy as jnp
from jax.experimental import pallas as pl
from jax.experimental.pallas import tpu as pltpu


def _attention_kernel(enc_ref, att2_ref, we_ref, wf_ref, awe_ref, alpha_ref):
    # enc_ref   : (Bt, P, E)  encoder features (compute dtype: f32 or bf16)
    # att2_ref  : (Bt, A)     precomputed decoder projection (incl. b_dec + b_enc), f32
    # we_ref    : (E, A)      encoder_att weight (compute dtype), single-buffered
    # wf_ref    : (1, A)      full_att weight as a row (f32), single-buffered
    # awe_ref   : (Bt, E)     attention-weighted encoding (f32)
    # alpha_ref : (Bt, P)     attention weights (f32)
    Bt, P, E = enc_ref.shape
    A = we_ref.shape[1]

    enc = enc_ref[...]                                            # (Bt, P, E)

    # --- encoder projection: one MXU matmul over the flattened batch slab ---
    att1 = jnp.dot(enc.reshape(Bt * P, E), we_ref[...],
                   preferred_element_type=jnp.float32)            # (Bt*P, A)
    att1 = att1.reshape(Bt, P, A)

    # relu(att1 + att2)   (att2 already carries b_enc + b_dec)
    h = jnp.maximum(att1 + att2_ref[...][:, None, :], 0.0)        # (Bt, P, A)

    # --- scoring, lane-major: pixels land in the lane dimension -------------
    # b_full omitted: softmax is shift-invariant, a uniform score offset
    # cannot change alpha or the weighted encoding.
    att = jnp.sum(h * wf_ref[...], axis=-1)                       # (Bt, P)

    # --- softmax over pixels (lane axis) ------------------------------------
    m = jnp.max(att, axis=-1, keepdims=True)                      # (Bt, 1)
    e = jnp.exp(att - m)                                          # (Bt, P)
    denom = jnp.sum(e, axis=-1, keepdims=True)                    # (Bt, 1)
    alpha = e * pl.reciprocal(denom, approx=True)                 # (Bt, P)

    # --- attention-weighted encoding via batched MXU matmul ------------------
    awe = jnp.einsum('bqp,bpe->bqe',
                     alpha[:, None, :].astype(enc.dtype), enc,
                     preferred_element_type=jnp.float32)          # (Bt, 1, E)

    awe_ref[...] = awe.reshape(Bt, E).astype(awe_ref.dtype)       # lane-dense slab
    alpha_ref[...] = alpha.astype(alpha_ref.dtype)                # lane-dense slab


def attention_forward(encoder_out, decoder_hidden, params, *,
                      block_b=8, compute_dtype=jnp.bfloat16):
    """encoder_out: (B, P, E), decoder_hidden: (B, D). Returns ((B, E), (B, P))."""
    B, P, E = encoder_out.shape
    A = params["w_enc"].shape[1]

    # ---- host-side (XLA) prep -------------------------------------------
    # Decoder projection for the whole batch in a single GEMM, with BOTH
    # biases folded in (kernel never sees b_enc; b_full is dropped entirely).
    att2 = (decoder_hidden @ params["w_dec"]
            + params["b_dec"] + params["b_enc"]).astype(jnp.float32)      # (B, A)

    enc_c = encoder_out.astype(compute_dtype)
    w_enc = params["w_enc"].astype(compute_dtype)
    wf_row = params["w_full"].reshape(1, A).astype(jnp.float32)           # row form

    # Ensure >=2 grid steps when possible so both v7x TensorCores get work on
    # the "parallel" batch axis (halve block_b, floor 8 to keep (8,128)-safe
    # output tiles). On v5e/v6e (1 TC) this is neutral.
    eff_bb = block_b
    while eff_bb > 8 and pl.cdiv(B, eff_bb) < 2:
        eff_bb //= 2

    grid_b = pl.cdiv(B, eff_bb)
    B_pad = grid_b * eff_bb
    if B_pad != B:
        pad = B_pad - B
        enc_c = jnp.pad(enc_c, ((0, pad), (0, 0), (0, 0)))
        att2 = jnp.pad(att2, ((0, pad), (0, 0)))

    # ---- explicit VMEM budget (per grid step, +30% headroom) --------------
    esz = jnp.dtype(compute_dtype).itemsize
    enc_tile = eff_bb * P * E * esz          # double-buffered
    att2_tile = eff_bb * A * 4               # double-buffered
    w_enc_bytes = E * A * esz                # single-buffered (Buffered(1))
    wf_bytes = A * 4                         # single-buffered
    awe_tile = eff_bb * E * 4                # double-buffered
    alpha_tile = eff_bb * P * 4              # double-buffered
    interm = 2 * eff_bb * P * A * 4          # att1 / h f32 intermediates
    budget = (2 * enc_tile + 2 * att2_tile + w_enc_bytes + wf_bytes
              + 2 * (awe_tile + alpha_tile) + interm)
    vmem_limit = int(min(max(int(budget * 1.3), 32 << 20), 96 << 20))

    # Advisory cost estimate for the XLA scheduler.
    bytes_in = (enc_c.size * esz + att2.size * 4
                + w_enc.size * esz + wf_row.size * 4)
    bytes_out = B_pad * (E + P) * 4
    cost = pl.CostEstimate(
        flops=int(2 * B_pad * P * (E * A + A + E)),
        transcendentals=int(B_pad * (P + 1)),
        bytes_accessed=int(bytes_in + bytes_out),
    )

    out_shapes = (
        jax.ShapeDtypeStruct((B_pad, E), jnp.float32),   # attention_weighted_encoding
        jax.ShapeDtypeStruct((B_pad, P), jnp.float32),   # alpha
    )

    grid_spec = pltpu.PrefetchScalarGridSpec(
        num_scalar_prefetch=0,
        grid=(grid_b,),
        in_specs=[
            pl.BlockSpec((eff_bb, P, E), lambda b: (b, 0, 0)),   # encoder block (Buffered(2) default)
            pl.BlockSpec((eff_bb, A),    lambda b: (b, 0)),      # precomputed att2
            pl.BlockSpec((E, A), lambda b: (0, 0),
                         pipeline_mode=pl.Buffered(1)),          # W_enc (grid-invariant)
            pl.BlockSpec((1, A), lambda b: (0, 0),
                         pipeline_mode=pl.Buffered(1)),          # w_full row (grid-invariant)
        ],
        out_specs=[
            pl.BlockSpec((eff_bb, E), lambda b: (b, 0)),         # lane-dense awe
            pl.BlockSpec((eff_bb, P), lambda b: (b, 0)),         # lane-dense alpha
        ],
    )

    awe, alpha = pl.pallas_call(
        _attention_kernel,
        out_shape=out_shapes,
        grid_spec=grid_spec,
        compiler_params=pltpu.CompilerParams(
            dimension_semantics=("parallel",),
            vmem_limit_bytes=vmem_limit),
        cost_estimate=cost,
    )(enc_c, att2, w_enc, wf_row)

    return awe[:B], alpha[:B]


def attention_reference(encoder_out, decoder_hidden, params):
    """Pure-JAX reference mirroring the PyTorch forward (incl. b_full)."""
    att1 = encoder_out @ params["w_enc"] + params["b_enc"][0]            # (B, P, A)
    att2 = decoder_hidden @ params["w_dec"] + params["b_dec"][0]         # (B, A)
    h = jnp.maximum(att1 + att2[:, None, :], 0.0)                        # (B, P, A)
    att = (h @ params["w_full"])[..., 0] + params["b_full"][0, 0]        # (B, P)
    alpha = jax.nn.softmax(att, axis=1)                                  # (B, P)
    awe = jnp.sum(encoder_out * alpha[:, :, None], axis=1)               # (B, E)
    return awe, alpha


def init_params(key, encoder_dim, decoder_dim, attention_dim):
    k = jax.random.split(key, 6)
    return {
        "w_enc": jax.random.normal(k[0], (encoder_dim, attention_dim), jnp.float32) * 0.1,
        "b_enc": jax.random.normal(k[1], (1, attention_dim), jnp.float32) * 0.1,
        "w_dec": jax.random.normal(k[2], (decoder_dim, attention_dim), jnp.float32) * 0.1,
        "b_dec": jax.random.normal(k[3], (1, attention_dim), jnp.float32) * 0.1,
        "w_full": jax.random.normal(k[4], (attention_dim, 1), jnp.float32) * 0.1,
        "b_full": jax.random.normal(k[5], (1, 1), jnp.float32) * 0.1,
    }


if __name__ == "__main__":
    B, P = 16, 16              # batch (2 grid steps of 8), num_pixels
    encoder_dim, decoder_dim, attention_dim = 32, 24, 32

    key = jax.random.PRNGKey(0)
    k_enc, k_dec, k_param = jax.random.split(key, 3)

    encoder_out = jax.random.normal(k_enc, (B, P, encoder_dim), jnp.float32)
    decoder_hidden = jax.random.normal(k_dec, (B, decoder_dim), jnp.float32)
    params = init_params(k_param, encoder_dim, decoder_dim, attention_dim)

    awe_ref, alpha_ref = attention_reference(encoder_out, decoder_hidden, params)

    # Default path: bf16 operands, f32 accumulation (v6e/v7x MXU friendly).
    awe_bf, alpha_bf = attention_forward(encoder_out, decoder_hidden, params)
    jax.block_until_ready((awe_bf, alpha_bf))
    assert jnp.allclose(awe_bf, awe_ref, atol=5e-2, rtol=5e-2), "awe mismatch (bf16)"
    assert jnp.allclose(alpha_bf, alpha_ref, atol=5e-2, rtol=5e-2), "alpha mismatch (bf16)"

    # f32 compute path (approx reciprocal in softmax -> slightly looser tol).
    awe, alpha = attention_forward(encoder_out, decoder_hidden, params,
                                   block_b=8, compute_dtype=jnp.float32)
    jax.block_until_ready((awe, alpha))
    assert jnp.allclose(awe, awe_ref, atol=2e-3, rtol=2e-3), "awe mismatch (f32)"
    assert jnp.allclose(alpha, alpha_ref, atol=2e-3, rtol=2e-3), "alpha mismatch (f32)"

    # Ragged batch (exercises the padding path: B=5 -> padded to 8, grid=1).
    awe_r, alpha_r = attention_forward(encoder_out[:5], decoder_hidden[:5], params,
                                       block_b=8, compute_dtype=jnp.float32)
    jax.block_until_ready((awe_r, alpha_r))
    assert jnp.allclose(awe_r, awe_ref[:5], atol=2e-3, rtol=2e-3), "awe mismatch (ragged)"
    assert jnp.allclose(alpha_r, alpha_ref[:5], atol=2e-3, rtol=2e-3), "alpha mismatch (ragged)"

    # Larger block_b path with auto-halving so grid_b >= 2 (v7x dual-TC).
    awe_l, alpha_l = attention_forward(encoder_out, decoder_hidden, params,
                                       block_b=16, compute_dtype=jnp.bfloat16)
    jax.block_until_ready((awe_l, alpha_l))
    assert jnp.allclose(awe_l, awe_ref, atol=5e-2, rtol=5e-2), "awe mismatch (block_b=16)"
    assert jnp.allclose(alpha_l, alpha_ref, atol=5e-2, rtol=5e-2), "alpha mismatch (block_b=16)"

    print("KERNEL_OK")
</pallas_src>

<mosaic_0001>
module attributes {stable_mosaic.version = 11 : i64} {
  func.func @_attention_kernel(%arg0: i32, %arg1: memref<8x16x32xbf16, #tpu.memory_space<vmem>>, %arg2: memref<8x32xf32, #tpu.memory_space<vmem>>, %arg3: memref<32x32xbf16, #tpu.memory_space<vmem>>, %arg4: memref<1x32xf32, #tpu.memory_space<vmem>>, %arg5: memref<8x32xf32, #tpu.memory_space<vmem>>, %arg6: memref<8x16xf32, #tpu.memory_space<vmem>>) attributes {dimension_semantics = [#tpu.dimension_semantics<parallel>], iteration_bounds = array<i64: 2>, scalar_prefetch = 0 : i64, scratch_operands = 0 : i64, tpu.core_type = #tpu.core_type<tc>, window_params = [{transform_indices = @transform_0, window_bounds = array<i64: 8, 16, 32>}, {transform_indices = @transform_1, window_bounds = array<i64: 8, 32>}, {pipeline_mode = #tpu.pipeline_mode<synchronous>, transform_indices = @transform_2, window_bounds = array<i64: 32, 32>}, {pipeline_mode = #tpu.pipeline_mode<synchronous>, transform_indices = @transform_3, window_bounds = array<i64: 1, 32>}, {transform_indices = @transform_4, window_bounds = array<i64: 8, 32>}, {transform_indices = @transform_5, window_bounds = array<i64: 8, 16>}]} {
    %c0 = arith.constant 0 : index
    %c0_0 = arith.constant 0 : index
    %c0_1 = arith.constant 0 : index
    %0 = vector.load %arg1[%c0, %c0_0, %c0_1] : memref<8x16x32xbf16, #tpu.memory_space<vmem>>, vector<8x16x32xbf16>
    %1 = vector.shape_cast %0 : vector<8x16x32xbf16> to vector<128x32xbf16>
    %c0_2 = arith.constant 0 : index
    %c0_3 = arith.constant 0 : index
    %2 = vector.load %arg3[%c0_2, %c0_3] : memref<32x32xbf16, #tpu.memory_space<vmem>>, vector<32x32xbf16>
    %cst = arith.constant dense<0.000000e+00> : vector<128x32xf32>
    %3 = tpu.matmul %1, %2, %cst {dimension_numbers = #tpu.dot_dimension_numbers<[1], [0], [0], [1], [0, 0, 1, 1], [], []>} : vector<128x32xbf16>, vector<32x32xbf16>, vector<128x32xf32> -> vector<128x32xf32>
    %4 = vector.shape_cast %3 : vector<128x32xf32> to vector<8x16x32xf32>
    %c0_4 = arith.constant 0 : index
    %c0_5 = arith.constant 0 : index
    %5 = vector.load %arg2[%c0_4, %c0_5] : memref<8x32xf32, #tpu.memory_space<vmem>>, vector<8x32xf32>
    %6 = vector.shape_cast %5 : vector<8x32xf32> to vector<8x1x32xf32>
    %7 = vector.broadcast %6 : vector<8x1x32xf32> to vector<8x16x32xf32>
    %8 = arith.addf %4, %7 : vector<8x16x32xf32>
    %cst_6 = arith.constant 0.000000e+00 : f32
    %9 = vector.broadcast %cst_6 : f32 to vector<8x16x32xf32>
    %10 = arith.maximumf %8, %9 : vector<8x16x32xf32>
    %c0_7 = arith.constant 0 : index
    %c0_8 = arith.constant 0 : index
    %11 = vector.load %arg4[%c0_7, %c0_8] : memref<1x32xf32, #tpu.memory_space<vmem>>, vector<1x32xf32>
    %12 = vector.shape_cast %11 : vector<1x32xf32> to vector<1x1x32xf32>
    %13 = vector.broadcast %12 : vector<1x1x32xf32> to vector<8x16x32xf32>
    %14 = arith.mulf %10, %13 : vector<8x16x32xf32>
    %cst_9 = arith.constant dense<0.000000e+00> : vector<8x16xf32>
    %15 = vector.multi_reduction <add>, %14, %cst_9 [2] : vector<8x16x32xf32> to vector<8x16xf32>
    %cst_10 = arith.constant dense<0xFF800000> : vector<8xf32>
    %16 = vector.multi_reduction <maximumf>, %15, %cst_10 [1] : vector<8x16xf32> to vector<8xf32>
    %17 = vector.shape_cast %16 : vector<8xf32> to vector<8x1xf32>
    %18 = vector.broadcast %17 : vector<8x1xf32> to vector<8x16xf32>
    %19 = arith.subf %15, %18 : vector<8x16xf32>
    %20 = math.exp %19 : vector<8x16xf32>
    %cst_11 = arith.constant dense<0.000000e+00> : vector<8xf32>
    %21 = vector.multi_reduction <add>, %20, %cst_11 [1] : vector<8x16xf32> to vector<8xf32>
    %22 = vector.shape_cast %21 : vector<8xf32> to vector<8x1xf32>
    %23 = tpu.reciprocal %22 {approx = true} : vector<8x1xf32> -> vector<8x1xf32>
    %24 = vector.broadcast %23 : vector<8x1xf32> to vector<8x16xf32>
    %25 = arith.mulf %20, %24 : vector<8x16xf32>
    %26 = vector.shape_cast %25 : vector<8x16xf32> to vector<8x1x16xf32>
    %27 = arith.truncf %26 : vector<8x1x16xf32> to vector<8x1x16xbf16>
    "tpu.trace_start"() <{level = 10 : i32, message = "bqp,bpe->bqe"}> : () -> ()
    %cst_12 = arith.constant dense<0.000000e+00> : vector<8x1x32xf32>
    %28 = tpu.matmul %27, %0, %cst_12 {dimension_numbers = #tpu.dot_dimension_numbers<[2], [1], [1], [2], [0, 0, 0, 1, 1, 2], [0], [0]>} : vector<8x1x16xbf16>, vector<8x16x32xbf16>, vector<8x1x32xf32> -> vector<8x1x32xf32>
    "tpu.trace_stop"() : () -> ()
    %29 = vector.shape_cast %28 : vector<8x1x32xf32> to vector<8x32xf32>
    %c0_13 = arith.constant 0 : index
    %c0_14 = arith.constant 0 : index
    %30 = vector.load %arg5[%c0_13, %c0_14] : memref<8x32xf32, #tpu.memory_space<vmem>>, vector<8x32xf32>
    tpu.vector_store %arg5[%c0_13, %c0_14], %29 {strides = array<i32>} : memref<8x32xf32, #tpu.memory_space<vmem>>, vector<8x32xf32>,
    %c0_15 = arith.constant 0 : index
    %c0_16 = arith.constant 0 : index
    %31 = vector.load %arg6[%c0_15, %c0_16] : memref<8x16xf32, #tpu.memory_space<vmem>>, vector<8x16xf32>
    tpu.vector_store %arg6[%c0_15, %c0_16], %25 {strides = array<i32>} : memref<8x16xf32, #tpu.memory_space<vmem>>, vector<8x16xf32>,
    return
  }
  func.func @transform_0(%arg0: i32) -> (i32, i32, i32) {
    %c0_i32 = arith.constant 0 : i32
    %c0_i32_0 = arith.constant 0 : i32
    %c0_i32_1 = arith.constant 0 : i32
    return %arg0, %c0_i32, %c0_i32_0 : i32, i32, i32
  }
  func.func @transform_1(%arg0: i32) -> (i32, i32) {
    %c0_i32 = arith.constant 0 : i32
    %c0_i32_0 = arith.constant 0 : i32
    return %arg0, %c0_i32 : i32, i32
  }
  func.func @transform_2(%arg0: i32) -> (i32, i32) {
    %c0_i32 = arith.constant 0 : i32
    %c0_i32_0 = arith.constant 0 : i32
    %c0_i32_1 = arith.constant 0 : i32
    return %c0_i32, %c0_i32_0 : i32, i32
  }
  func.func @transform_3(%arg0: i32) -> (i32, i32) {
    %c0_i32 = arith.constant 0 : i32
    %c0_i32_0 = arith.constant 0 : i32
    %c0_i32_1 = arith.constant 0 : i32
    return %c0_i32, %c0_i32_0 : i32, i32
  }
  func.func @transform_4(%arg0: i32) -> (i32, i32) {
    %c0_i32 = arith.constant 0 : i32
    %c0_i32_0 = arith.constant 0 : i32
    return %arg0, %c0_i32 : i32, i32
  }
  func.func @transform_5(%arg0: i32) -> (i32, i32) {
    %c0_i32 = arith.constant 0 : i32
    %c0_i32_0 = arith.constant 0 : i32
    return %arg0, %c0_i32 : i32, i32
  }
}

</mosaic_0001>

<llo_original>
// kernel: tpu_custom_call.1
$region0: #{tpu_custom_call.1}
  #allocation0 [shape = 'u32[]', space=smem, size = 0x4, offset = 0x4, fixed_abs, tag = 'smem constant byte address 0x4 - core index']
  #allocation1 [shape = 'u32[144,128]{1,0:T(1,128)}', space=vmem, size = 0x12000, scoped, tag = 'internal scratch']
  %s0 = inlined_call_operand.hbm [shape: bf16[16,16,32], index: 0, kind: input, shape index: {}]
  %s1 = inlined_call_operand.hbm [shape: f32[16,32], index: 1, kind: input, shape index: {}]
  %s2 = inlined_call_operand.hbm [shape: bf16[32,32], index: 2, kind: input, shape index: {}]
  %s3 = inlined_call_operand.vmem [shape: f32[1,32], index: 3, kind: input, shape index: {}]
  %s4 = inlined_call_operand.hbm [shape: f32[16,32], index: 4, kind: output, shape index: {0}]
  %s5 = inlined_call_operand.hbm [shape: f32[16,16], index: 5, kind: output, shape index: {1}]
  %6 = xla_tuple %s4, %s5
  %s7 = sld [smem:[#allocation0]]
  $region69: #{tpu_custom_call.1} parent=0
    _
  %s9 = ssub.s32 1, %s7
  %s10 = scalar_select 0, %s9, %s7
  $region1: #{tpu_custom_call.1} parent=0
    #allocation2 [shape = 'u8[65536]{0}', space=vmem, size = 0x10000, scoped, tag = 'input window, operand 0']
    #allocation3 [shape = 's32[2]{0}', space=sflag, size = 0x8, scoped, tag = 'scoped memory for tpu_custom_call.1']
    #allocation4 [shape = 's32[2]{0}', space=sflag, size = 0x8, scoped, tag = 'scoped memory for tpu_custom_call.1']
    #allocation5 [shape = 'u8[8192]{0}', space=vmem, size = 0x2000, scoped, tag = 'input window, operand 1']
    #allocation6 [shape = 's32[2]{0}', space=sflag, size = 0x8, scoped, tag = 'scoped memory for tpu_custom_call.1']
    #allocation7 [shape = 'u8[8192]{0}', space=vmem, size = 0x2000, scoped, tag = 'input window, operand 2, single buffered']
    #allocation8 [shape = 'u8[8192]{0}', space=vmem, size = 0x2000, scoped, tag = 'output window, operand 0']
    #allocation9 [shape = 'u8[8192]{0}', space=vmem, size = 0x2000, scoped, tag = 'output window, operand 1']
    #allocation10 [shape = 's32[2]{0}', space=sflag, size = 0x8, scoped, tag = 'scoped memory for tpu_custom_call.1']
    %11 = vsyncpa [#allocation3], 0
    %s12 = scalar_lea.sflag [#allocation3], 1
    %13 = vsyncpa %s12, 0
    %14 = vsyncpa [#allocation6], 0
    %s15 = scalar_lea.sflag [#allocation6], 1
    %16 = vsyncpa %s15, 0
    %17 = vsyncpa [#allocation4], 0
    %s18 = scalar_lea.sflag [#allocation4], 1
    %19 = vsyncpa %s18, 0
    %20 = vsyncpa [#allocation10], 0
    %s21 = scalar_lea.sflag [#allocation10], 1
    %22 = vsyncpa %s21, 0
    loop: start=0, step=1, limit=4
    $region2: #{tpu_custom_call.1} parent=1 // loop_pre_header
      _
    $region3: #{tpu_custom_call.1} parent=1 // loop_header
      %s24 = sphi 0, %s28
      %p25 = scmp.ge.s32.totalorder %s24, 4
      %s34 = sphi 0, %s36
      %s37 = sphi 0, %s34
      %s38 = sphi 0, %s37
      %s54 = sphi 0, %s38
      %s60 = sphi 0, %s62
      %s63 = sphi 0, %s60
      %s64 = sphi 0, %s63
      %s80 = sphi 0, %s64
      %s84 = sphi 0, %s84
      %s86 = sphi 0, %s84
      %s87 = sphi 0, %s86
      %s101 = sphi 0, %s87
      %s105 = sphi 0, %s105
      %s107 = sphi 0, %s105
      %s108 = sphi 0, %s107
      %s122 = sphi 0, %s108
      %s128 = sphi 0, %s130
      %s131 = sphi 0, %s128
      %s132 = sphi 0, %s131
      %s148 = sphi 0, %s132
      %s154 = sphi 0, %s156
      %s157 = sphi 0, %s154
      %s158 = sphi 0, %s157
      %s174 = sphi 0, %s158
    $region4: #{tpu_custom_call.1} parent=1 // loop_header_branch
      %27 = sbr.rel (%p25) target = $region8
    $region5: #{tpu_custom_call.1} parent=1 // loop_body
      %s29 = ssub.s32 %s24, 1
      %s30 = ssub.s32 %s24, 2
      %s31 = sadd.s32 %s24, 1
      %s32 = ssub.s32 %s24, %s31
      %p33 = scmp.eq.s32.totalorder %s32, 0
      %s35 = sadd.s32 %s34, 1
      %s36 = scalar_select %p33, %s34, %s35
      %p39 = pneg %p33
      %p40 = scmp.eq.s32.totalorder %s24, 1
      %p41 = por %p39, %p40
      %p42 = scmp.ne.s32.totalorder %s34, %s37
      %p43 = scmp.eq.s32.totalorder %s24, 0
      %p44 = por %p42, %p43
      %p45 = scmp.ne.s32.totalorder %s34, %s37
      %p46 = scmp.eq.s32.totalorder %s29, 1
      %p47 = por %p45, %p46
      %p48 = scmp.ne.s32.totalorder %s37, %s38
      %p49 = scmp.eq.s32.totalorder %s29, 0
      %p50 = por %p48, %p49
      %p51 = scmp.ne.s32.totalorder %s37, %s38
      %p52 = scmp.eq.s32.totalorder %s30, 1
      %p53 = por %p51, %p52
      %p55 = scmp.ne.s32.totalorder %s38, %s54
      %p56 = scmp.eq.s32.totalorder %s30, 0
      %p57 = por %p55, %p56
      %s58 = ssub.s32 %s24, %s31
      %p59 = scmp.eq.s32.totalorder %s58, 0
      %s61 = sadd.s32 %s60, 1
      %s62 = scalar_select %p59, %s60, %s61
      %p65 = pneg %p59
      %p66 = scmp.eq.s32.totalorder %s24, 1
      %p67 = por %p65, %p66
      %p68 = scmp.ne.s32.totalorder %s60, %s63
      %p69 = scmp.eq.s32.totalorder %s24, 0
      %p70 = por %p68, %p69
      %p71 = scmp.ne.s32.totalorder %s60, %s63
      %p72 = scmp.eq.s32.totalorder %s29, 1
      %p73 = por %p71, %p72
      %p74 = scmp.ne.s32.totalorder %s63, %s64
      %p75 = scmp.eq.s32.totalorder %s29, 0
      %p76 = por %p74, %p75
      %p77 = scmp.ne.s32.totalorder %s63, %s64
      %p78 = scmp.eq.s32.totalorder %s30, 1
      %p79 = por %p77, %p78
      %p81 = scmp.ne.s32.totalorder %s64, %s80
      %p82 = scmp.eq.s32.totalorder %s30, 0
      %p83 = por %p81, %p82
      %s85 = sadd.s32 %s84, 1
      %p88 = scmp.eq.s32.totalorder %s24, 1
      %p89 = scmp.ne.s32.totalorder %s84, %s86
      %p90 = scmp.eq.s32.totalorder %s24, 0
      %p91 = por %p89, %p90
      %p92 = scmp.ne.s32.totalorder %s84, %s86
      %p93 = scmp.eq.s32.totalorder %s29, 1
      %p94 = por %p92, %p93
      %p95 = scmp.ne.s32.totalorder %s86, %s87
      %p96 = scmp.eq.s32.totalorder %s29, 0
      %p97 = por %p95, %p96
      %p98 = scmp.ne.s32.totalorder %s86, %s87
      %p99 = scmp.eq.s32.totalorder %s30, 1
      %p100 = por %p98, %p99
      %p102 = scmp.ne.s32.totalorder %s87, %s101
      %p103 = scmp.eq.s32.totalorder %s30, 0
      %p104 = por %p102, %p103
      %s106 = sadd.s32 %s105, 1
      %p109 = scmp.eq.s32.totalorder %s24, 1
      %p110 = scmp.ne.s32.totalorder %s105, %s107
      %p111 = scmp.eq.s32.totalorder %s24, 0
      %p112 = por %p110, %p111
      %p113 = scmp.ne.s32.totalorder %s105, %s107
      %p114 = scmp.eq.s32.totalorder %s29, 1
      %p115 = por %p113, %p114
      %p116 = scmp.ne.s32.totalorder %s107, %s108
      %p117 = scmp.eq.s32.totalorder %s29, 0
      %p118 = por %p116, %p117
      %p119 = scmp.ne.s32.totalorder %s107, %s108
      %p120 = scmp.eq.s32.totalorder %s30, 1
      %p121 = por %p119, %p120
      %p123 = scmp.ne.s32.totalorder %s108, %s122
      %p124 = scmp.eq.s32.totalorder %s30, 0
      %p125 = por %p123, %p124
      %s126 = ssub.s32 %s24, %s31
      %p127 = scmp.eq.s32.totalorder %s126, 0
      %s129 = sadd.s32 %s128, 1
      %s130 = scalar_select %p127, %s128, %s129
      %p133 = pneg %p127
      %p134 = scmp.eq.s32.totalorder %s24, 1
      %p135 = por %p133, %p134
      %p136 = scmp.ne.s32.totalorder %s128, %s131
      %p137 = scmp.eq.s32.totalorder %s24, 0
      %p138 = por %p136, %p137
      %p139 = scmp.ne.s32.totalorder %s128, %s131
      %p140 = scmp.eq.s32.totalorder %s29, 1
      %p141 = por %p139, %p140
      %p142 = scmp.ne.s32.totalorder %s131, %s132
      %p143 = scmp.eq.s32.totalorder %s29, 0
      %p144 = por %p142, %p143
      %p145 = scmp.ne.s32.totalorder %s131, %s132
      %p146 = scmp.eq.s32.totalorder %s30, 1
      %p147 = por %p145, %p146
      %p149 = scmp.ne.s32.totalorder %s132, %s148
      %p150 = scmp.eq.s32.totalorder %s30, 0
      %p151 = por %p149, %p150
      %s152 = ssub.s32 %s24, %s31
      %p153 = scmp.eq.s32.totalorder %s152, 0
      %s155 = sadd.s32 %s154, 1
      %s156 = scalar_select %p153, %s154, %s155
      %p159 = pneg %p153
      %p160 = scmp.eq.s32.totalorder %s24, 1
      %p161 = por %p159, %p160
      %p162 = scmp.ne.s32.totalorder %s154, %s157
      %p163 = scmp.eq.s32.totalorder %s24, 0
      %p164 = por %p162, %p163
      %p165 = scmp.ne.s32.totalorder %s154, %s157
      %p166 = scmp.eq.s32.totalorder %s29, 1
      %p167 = por %p165, %p166
      %p168 = scmp.ne.s32.totalorder %s157, %s158
      %p169 = scmp.eq.s32.totalorder %s29, 0
      %p170 = por %p168, %p169
      %p171 = scmp.ne.s32.totalorder %s157, %s158
      %p172 = scmp.eq.s32.totalorder %s30, 1
      %p173 = por %p171, %p172
      %p175 = scmp.ne.s32.totalorder %s158, %s174
      %p176 = scmp.eq.s32.totalorder %s30, 0
      %p177 = por %p175, %p176
      %p178 = scmp.le.s32.totalorder 1, %s24
      %p179 = scmp.lt.s32.totalorder %s24, 3
      %p180 = pnand %p178, %p179
      %p181 = pneg %p180
      // Predicated region
      $region9: #{tpu_custom_call.1} parent=5 // pred_check
        _
      $region10: #{tpu_custom_call.1} parent=5 // pred_check_branch
        %183 = sbr.rel (%p180) target = $region12
      $region11: #{tpu_custom_call.1} parent=5 // pred_region
        %s184 = ssub.s32 %s24, 1
        // Predicated region
        $region13: #{tpu_custom_call.1} parent=11 // pred_check
          %p185 = pneg %p97
        $region14: #{tpu_custom_call.1} parent=11 // pred_check_branch
          %187 = sbr.rel (%p185) target = $region16
        $region15: #{tpu_custom_call.1} parent=11 // pred_region
          %s189 = ssub.s32 256, 256
          %190 = vsyncadd [#allocation6], %s189
          %s191 = sshll.u32 [#allocation7], 4
          %s192 = int_to_ptr.vmem [resolvable:$true] %s191
          %197 = dma.hbm_to_vmem [thread:$0]  %s2, 256, %s192, [#allocation6], 64, 64, 4
        $region16: #{tpu_custom_call.1} parent=11 // pred_fallthru
          _
        // Predicated region
        $region17: #{tpu_custom_call.1} parent=11 // pred_check
          %p198 = pneg %p118
        $region18: #{tpu_custom_call.1} parent=11 // pred_check_branch
          %200 = sbr.rel (%p198) target = $region20
        $region19: #{tpu_custom_call.1} parent=11 // pred_region
          _
        $region20: #{tpu_custom_call.1} parent=11 // pred_fallthru
          _
      $region12: #{tpu_custom_call.1} parent=5 // pred_fallthru
        _
      %p201 = scmp.lt.s32.totalorder %s24, 2
      // Predicated region
      $region21: #{tpu_custom_call.1} parent=5 // pred_check
        %p202 = pneg %p201
      $region22: #{tpu_custom_call.1} parent=5 // pred_check_branch
        %204 = sbr.rel (%p202) target = $region24
      $region23: #{tpu_custom_call.1} parent=5 // pred_region
        // Predicated region
        $region25: #{tpu_custom_call.1} parent=23 // pred_check
          %p205 = pneg %p44
        $region26: #{tpu_custom_call.1} parent=23 // pred_check_branch
          %207 = sbr.rel (%p205) target = $region28
        $region27: #{tpu_custom_call.1} parent=23 // pred_region
          %s208 = sand.u32 %s34, 1
          %s209 = scalar_lea.sflag [#allocation3], %s208
          %s210 = sand.u32 %s34, 1
          %s211 = smul.addr %s210, 64
          %s212 = scalar_lea.vmem [#allocation2], %s211
          %s213 = smul.u32 8, %s24
          %s215 = ssub.s32 1024, 1024
          %216 = vsyncadd %s209, %s215
          %s217 = smul.addr %s213, 2
          %s218 = smul.addr %s217, 64
          %s219 = scalar_lea.hbm %s0, %s218
          %s220 = sshll.u32 %s212, 4
          %s221 = int_to_ptr.vmem [resolvable:$true] %s220
          %226 = dma.hbm_to_vmem [thread:$0]  %s219, 1024, %s221, %s209, 64, 64, 4
        $region28: #{tpu_custom_call.1} parent=23 // pred_fallthru
          _
        // Predicated region
        $region29: #{tpu_custom_call.1} parent=23 // pred_check
          %p227 = pneg %p70
        $region30: #{tpu_custom_call.1} parent=23 // pred_check_branch
          %229 = sbr.rel (%p227) target = $region32
        $region31: #{tpu_custom_call.1} parent=23 // pred_region
          %s230 = sand.u32 %s24, 1
          %s231 = scalar_lea.sflag [#allocation6], %s230
          %s232 = sand.u32 %s60, 1
          %s233 = smul.addr %s232, 8
          %s234 = scalar_lea.vmem [#allocation5], %s233
          %s236 = ssub.s32 128, 128
          %237 = vsyncadd %s231, %s236
          %s238 = smul.addr %s24, 128
          %s239 = scalar_lea.hbm %s1, %s238
          %s241 = sshll.u32 %s234, 4
          %s242 = int_to_ptr.vmem [resolvable:$true] %s241
          %244 = dma.hbm_to_vmem [thread:$0]  %s239, 128, %s242, %s231
        $region32: #{tpu_custom_call.1} parent=23 // pred_fallthru
          _
      $region24: #{tpu_custom_call.1} parent=5 // pred_fallthru
        _
      %p245 = scmp.le.s32.totalorder 1, %s24
      %p246 = scmp.lt.s32.totalorder %s24, 3
      %p247 = pnand %p245, %p246
      %p248 = pneg %p247
      // Predicated region
      $region33: #{tpu_custom_call.1} parent=5 // pred_check
        _
      $region34: #{tpu_custom_call.1} parent=5 // pred_check_branch
        %250 = sbr.rel (%p247) target = $region36
      $region35: #{tpu_custom_call.1} parent=5 // pred_region
        %s251 = ssub.s32 %s24, 1
        %s252 = sand.u32 %s37, 1
        %s253 = scalar_lea.sflag [#allocation3], %s252
        %s254 = sand.u32 %s37, 1
        %s255 = smul.addr %s254, 64
        %s256 = scalar_lea.vmem [#allocation2], %s255
        // Predicated region
        $region37: #{tpu_custom_call.1} parent=35 // pred_check
          %p257 = pneg %p50
        $region38: #{tpu_custom_call.1} parent=35 // pred_check_branch
          %259 = sbr.rel (%p257) target = $region40
        $region39: #{tpu_custom_call.1} parent=35 // pred_region
          %260 = dma.done %s253, 1024
        $region40: #{tpu_custom_call.1} parent=35 // pred_fallthru
          _
        %s261 = sand.u32 %s29, 1
        %s262 = scalar_lea.sflag [#allocation6], %s261
        %s263 = sand.u32 %s63, 1
        %s264 = smul.addr %s263, 8
        %s265 = scalar_lea.vmem [#allocation5], %s264
        // Predicated region
        $region41: #{tpu_custom_call.1} parent=35 // pred_check
          %p266 = pneg %p76
        $region42: #{tpu_custom_call.1} parent=35 // pred_check_branch
          %268 = sbr.rel (%p266) target = $region44
        $region43: #{tpu_custom_call.1} parent=35 // pred_region
          %269 = dma.done %s262, 128
        $region44: #{tpu_custom_call.1} parent=35 // pred_fallthru
          _
        // Predicated region
        $region45: #{tpu_custom_call.1} parent=35 // pred_check
          %p270 = pneg %p97
        $region46: #{tpu_custom_call.1} parent=35 // pred_check_branch
          %272 = sbr.rel (%p270) target = $region48
        $region47: #{tpu_custom_call.1} parent=35 // pred_region
          %273 = dma.done [#allocation6], 256
        $region48: #{tpu_custom_call.1} parent=35 // pred_fallthru
          _
        %s274 = sand.u32 %s37, 1
        %s275 = scalar_lea.sflag [#allocation3], %s274
        %s276 = sand.u32 %s37, 1
        %s277 = smul.addr %s276, 64
        %s278 = scalar_lea.vmem [#allocation2], %s277
        %p279 = pneg %p50
        %p280 = pneg %p47
        %s281 = sand.u32 %s29, 1
        %s282 = scalar_lea.sflag [#allocation6], %s281
        %s283 = sand.u32 %s63, 1
        %s284 = smul.addr %s283, 8
        %s285 = scalar_lea.vmem [#allocation5], %s284
        %p286 = pneg %p76
        %p287 = pneg %p73
        %p288 = pneg %p97
        %p289 = pneg %p94
        %p290 = pneg %p118
        %p291 = pneg %p115
        %p292 = pneg %p144
        %p293 = pneg %p141
        %s294 = sand.u32 %s131, 1
        %s295 = scalar_lea.sflag [#allocation4], %s294
        %s296 = sand.u32 %s131, 1
        %s297 = smul.addr %s296, 8
        %s298 = scalar_lea.vmem [#allocation8], %s297
        %p299 = pneg %p170
        %p300 = pneg %p167
        %s301 = sand.u32 %s157, 1
        %s302 = scalar_lea.sflag [#allocation10], %s301
        %s303 = sand.u32 %s157, 1
        %s304 = smul.addr %s303, 8
        %s305 = scalar_lea.vmem [#allocation9], %s304
        %s306 = smul.u32 8, %s29
        %v308 = vld [vmem:[%s256] sm:$0xf]
        %v309 = vld [vmem:[%s256 + $0x4] sm:$0xf]
        %v310 = vld [vmem:[%s256 + $0x8] sm:$0xf]
        %v311 = vld [vmem:[%s256 + $0xc] sm:$0xf]
        %v312 = vld [vmem:[%s256 + $0x10] sm:$0xf]
        %v313 = vld [vmem:[%s256 + $0x14] sm:$0xf]
        %v314 = vld [vmem:[%s256 + $0x18] sm:$0xf]
        %v315 = vld [vmem:[%s256 + $0x1c] sm:$0xf]
        %v316 = vld [vmem:[%s256 + $0x20] sm:$0xf]
        %v317 = vld [vmem:[%s256 + $0x24] sm:$0xf]
        %v318 = vld [vmem:[%s256 + $0x28] sm:$0xf]
        %v319 = vld [vmem:[%s256 + $0x2c] sm:$0xf]
        %v320 = vld [vmem:[%s256 + $0x30] sm:$0xf]
        %v321 = vld [vmem:[%s256 + $0x34] sm:$0xf]
        %v322 = vld [vmem:[%s256 + $0x38] sm:$0xf]
        %v323 = vld [vmem:[%s256 + $0x3c] sm:$0xf]
        %v324 = vld [vmem:[#allocation7] sm:$0xf]
        %v325 = vld [vmem:[#allocation7 + $0x4] sm:$0xf]
        %v326 = vld [vmem:[#allocation7 + $0x8] sm:$0xf]
        %v327 = vld [vmem:[#allocation7 + $0xc] sm:$0xf]
        %v344 = vunpack.c.l.b16 %v308
        %v345 = vunpack.c.l.b16 %v309
        %v346 = vunpack.c.l.b16 %v310
        %v347 = vunpack.c.l.b16 %v311
        %v348 = vunpack.c.l.b16 %v312
        %v349 = vunpack.c.l.b16 %v313
        %v350 = vunpack.c.l.b16 %v314
        %v351 = vunpack.c.l.b16 %v315
        %v352 = vunpack.c.l.b16 %v316
        %v353 = vunpack.c.l.b16 %v317
        %v354 = vunpack.c.l.b16 %v318
        %v355 = vunpack.c.l.b16 %v319
        %v356 = vunpack.c.l.b16 %v320
        %v357 = vunpack.c.l.b16 %v321
        %v358 = vunpack.c.l.b16 %v322
        %v359 = vunpack.c.l.b16 %v323
        %v360 = vpack.c.b16 %v345, %v344
        %v361 = vpack.c.b16 %v347, %v346
        %v362 = vpack.c.b16 %v349, %v348
        %v363 = vpack.c.b16 %v351, %v350
        %v364 = vpack.c.b16 %v353, %v352
        %v365 = vpack.c.b16 %v355, %v354
        %v366 = vpack.c.b16 %v357, %v356
        %v367 = vpack.c.b16 %v359, %v358
        %v372 = vunpack.c.l.b16 %v324
        %v373 = vunpack.c.l.b16 %v325
        %v374 = vunpack.c.l.b16 %v326
        %v375 = vunpack.c.l.b16 %v327
        %v376 = vpack.c.b16 %v373, %v372
        %v377 = vpack.c.b16 %v375, %v374
        %vm380 = vcmask 261120
        %v382 = vsel %vm380, %v360, 0
        %v385 = vsel %vm380, %v361, 0
        %v388 = vsel %vm380, %v362, 0
        %v391 = vsel %vm380, %v363, 0
        %v394 = vsel %vm380, %v364, 0
        %v397 = vsel %vm380, %v365, 0
        %v400 = vsel %vm380, %v366, 0
        %v403 = vsel %vm380, %v367, 0
        %405 = vmatprep.subr.bf16.mxu0 0
        %406 = vmatpush1.bf16.msra.mxu0 %v376
        %407 = vmatprep.subr.bf16.mxu0 0
        %408 = vmatpush1.bf16.msra.mxu0 %v377
        %409 = vmatprep.subr.bf16.mxu0 0
        %410 = vmatpush1.bf16.msra.mxu0 0
        %411 = vmatprep.subr.bf16.mxu0 0
        %412 = vmatpush1.bf16.msra.mxu0 0
        %413 = vmatprep.subr.bf16.mxu0 0
        %414 = vmatpush1.bf16.msra.mxu0 0
        %415 = vmatprep.subr.bf16.mxu0 0
        %416 = vmatpush1.bf16.msra.mxu0 0
        %417 = vmatprep.subr.bf16.mxu0 0
        %418 = vmatpush1.bf16.msra.mxu0 0
        %419 = vmatprep.subr.bf16.mxu0 0
        %420 = vmatpush1.bf16.msra.mxu0 0
        %421 = vmatprep.subr.bf16.mxu0 0
        %422 = vmatpush1.bf16.msra.mxu0 0
        %423 = vmatprep.subr.bf16.mxu0 0
        %424 = vmatpush1.bf16.msra.mxu0 0
        %425 = vmatprep.subr.bf16.mxu0 0
        %426 = vmatpush1.bf16.msra.mxu0 0
        %427 = vmatprep.subr.bf16.mxu0 0
        %428 = vmatpush1.bf16.msra.mxu0 0
        %429 = vmatprep.subr.bf16.mxu0 0
        %430 = vmatpush1.bf16.msra.mxu0 0
        %431 = vmatprep.subr.bf16.mxu0 0
        %432 = vmatpush1.bf16.msra.mxu0 0
        %433 = vmatprep.subr.bf16.mxu0 0
        %434 = vmatpush1.bf16.msra.mxu0 0
        %435 = vmatprep.subr.bf16.mxu0 0
        %436 = vmatpush1.bf16.msra.mxu0 0
        %437 = vmatprep.mubr.bf16.mxu0 0
        %438 = vmatmul.mubr.bf16.gmra.mrb[0].mxu0 %v382
        %v439 = vpop.f32.mrb[0].mxu0
        %v440 = vadd.f32 0.0, %v439
        %v441 = vpop.f32.mrb[0].mxu0
        %v442 = vpop.f32.mrb[0].mxu0
        %v443 = vadd.f32 0.0, %v442
        %v444 = vpop.f32.mrb[0].mxu0
        %445 = vmatprep.mubr.bf16.mxu0 0
        %446 = vmatmul.mubr.bf16.gmra.mrb[0].mxu0 %v385
        %v447 = vpop.f32.mrb[0].mxu0
        %v448 = vadd.f32 0.0, %v447
        %v449 = vpop.f32.mrb[0].mxu0
        %v450 = vpop.f32.mrb[0].mxu0
        %v451 = vadd.f32 0.0, %v450
        %v452 = vpop.f32.mrb[0].mxu0
        %453 = vmatprep.mubr.bf16.mxu0 0
        %454 = vmatmul.mubr.bf16.gmra.mrb[0].mxu0 %v388
        %v455 = vpop.f32.mrb[0].mxu0
        %v456 = vadd.f32 0.0, %v455
        %v457 = vpop.f32.mrb[0].mxu0
        %v458 = vpop.f32.mrb[0].mxu0
        %v459 = vadd.f32 0.0, %v458
        %v460 = vpop.f32.mrb[0].mxu0
        %461 = vmatprep.mubr.bf16.mxu0 0
        %462 = vmatmul.mubr.bf16.gmra.mrb[0].mxu0 %v391
        %v463 = vpop.f32.mrb[0].mxu0
        %v464 = vadd.f32 0.0, %v463
        %v465 = vpop.f32.mrb[0].mxu0
        %v466 = vpop.f32.mrb[0].mxu0
        %v467 = vadd.f32 0.0, %v466
        %v468 = vpop.f32.mrb[0].mxu0
        %469 = vmatprep.mubr.bf16.mxu0 0
        %470 = vmatmul.mubr.bf16.gmra.mrb[0].mxu0 %v394
        %v471 = vpop.f32.mrb[0].mxu0
        %v472 = vadd.f32 0.0, %v471
        %v473 = vpop.f32.mrb[0].mxu0
        %v474 = vpop.f32.mrb[0].mxu0
        %v475 = vadd.f32 0.0, %v474
        %v476 = vpop.f32.mrb[0].mxu0
        %477 = vmatprep.mubr.bf16.mxu0 0
        %478 = vmatmul.mubr.bf16.gmra.mrb[0].mxu0 %v397
        %v479 = vpop.f32.mrb[0].mxu0
        %v480 = vadd.f32 0.0, %v479
        %v481 = vpop.f32.mrb[0].mxu0
        %v482 = vpop.f32.mrb[0].mxu0
        %v483 = vadd.f32 0.0, %v482
        %v484 = vpop.f32.mrb[0].mxu0
        %485 = vmatprep.mubr.bf16.mxu0 0
        %486 = vmatmul.mubr.bf16.gmra.mrb[0].mxu0 %v400
        %v487 = vpop.f32.mrb[0].mxu0
        %v488 = vadd.f32 0.0, %v487
        %v489 = vpop.f32.mrb[0].mxu0
        %v490 = vpop.f32.mrb[0].mxu0
        %v491 = vadd.f32 0.0, %v490
        %v492 = vpop.f32.mrb[0].mxu0
        %493 = vmatprep.mubr.bf16.mxu0 0
        %494 = vmatmul.mubr.bf16.gmra.mrb[0].mxu0 %v403
        %v495 = vpop.f32.mrb[0].mxu0
        %v496 = vadd.f32 0.0, %v495
        %v497 = vpop.f32.mrb[0].mxu0
        %v498 = vpop.f32.mrb[0].mxu0
        %v499 = vadd.f32 0.0, %v498
        %v500 = vpop.f32.mrb[0].mxu0
        %501 = vdwg.mxu0
        %v502 = vld [vmem:[%s265] sm:$0xff]
        %v504 = vcombine.high %v502, %v502
        %v506 = vunpack.c.l.s4 1966171168
        %v507 = vunpack.c.0.s8 %v506
        %v508 = vlaneseq
        %v509 = vshrl.u32 %v508, 7
        %v510 = vsub.s32 %v507, %v509
        %v511 = vrot.slane %v502, %v510
        %v513 = vunpack.c.l.s4 1966171168
        %v514 = vunpack.c.0.s8 %v513
        %v515 = vlaneseq
        %v516 = vshrl.u32 %v515, 7
        %v517 = vsub.s32 %v514, %v516
        %v518 = vrot.slane %v504, %v517
        %v519 = vcombine.high %v511, %v511
        %v520 = vcombine.high %v518, %v518
        %v522 = vunpack.c.l.s4 1966171168
        %v523 = vunpack.c.0.s8 %v522
        %v524 = vlaneseq
        %v525 = vshrl.u32 %v524, 7
        %v526 = vsub.s32 %v523, %v525
        %v527 = vrot.slane %v511, %v526
        %v529 = vunpack.c.l.s4 1966171168
        %v530 = vunpack.c.0.s8 %v529
        %v531 = vlaneseq
        %v532 = vshrl.u32 %v531, 7
        %v533 = vsub.s32 %v530, %v532
        %v534 = vrot.slane %v518, %v533
        %v536 = vunpack.c.l.s4 1966171168
        %v537 = vunpack.c.0.s8 %v536
        %v538 = vlaneseq
        %v539 = vshrl.u32 %v538, 7
        %v540 = vsub.s32 %v537, %v539
        %v541 = vrot.slane %v519, %v540
        %v543 = vunpack.c.l.s4 1966171168
        %v544 = vunpack.c.0.s8 %v543
        %v545 = vlaneseq
        %v546 = vshrl.u32 %v545, 7
        %v547 = vsub.s32 %v544, %v546
        %v548 = vrot.slane %v520, %v547
        %v549 = vcombine.high %v527, %v527
        %v550 = vcombine.high %v534, %v534
        %v551 = vcombine.high %v541, %v541
        %v552 = vcombine.high %v548, %v548
        %v553 = vlaneseq
        %v554 = vshrl.u32 %v553, 7
        %v555 = vsub.s32 0, %v554
        %v556 = vrot.slane %v527, %v555
        %v557 = vlaneseq
        %v558 = vshrl.u32 %v557, 7
        %v559 = vsub.s32 0, %v558
        %v560 = vrot.slane %v541, %v559
        %v561 = vlaneseq
        %v562 = vshrl.u32 %v561, 7
        %v563 = vsub.s32 0, %v562
        %v564 = vrot.slane %v549, %v563
        %v565 = vlaneseq
        %v566 = vshrl.u32 %v565, 7
        %v567 = vsub.s32 0, %v566
        %v568 = vrot.slane %v551, %v567
        %v569 = vlaneseq
        %v570 = vshrl.u32 %v569, 7
        %v571 = vsub.s32 0, %v570
        %v572 = vrot.slane %v534, %v571
        %v573 = vlaneseq
        %v574 = vshrl.u32 %v573, 7
        %v575 = vsub.s32 0, %v574
        %v576 = vrot.slane %v548, %v575
        %v577 = vlaneseq
        %v578 = vshrl.u32 %v577, 7
        %v579 = vsub.s32 0, %v578
        %v580 = vrot.slane %v550, %v579
        %v581 = vlaneseq
        %v582 = vshrl.u32 %v581, 7
        %v583 = vsub.s32 0, %v582
        %v584 = vrot.slane %v552, %v583
        %v593 = vadd.f32 %v440, %v556
        %v594 = vadd.f32 %v443, %v556
        %v595 = vadd.f32 %v448, %v560
        %v596 = vadd.f32 %v451, %v560
        %v597 = vadd.f32 %v456, %v564
        %v598 = vadd.f32 %v459, %v564
        %v599 = vadd.f32 %v464, %v568
        %v600 = vadd.f32 %v467, %v568
        %v601 = vadd.f32 %v472, %v572
        %v602 = vadd.f32 %v475, %v572
        %v603 = vadd.f32 %v480, %v576
        %v604 = vadd.f32 %v483, %v576
        %v605 = vadd.f32 %v488, %v580
        %v606 = vadd.f32 %v491, %v580
        %v607 = vadd.f32 %v496, %v584
        %v608 = vadd.f32 %v499, %v584
        %v609 = vmax.f32 %v593, 0.0
        %v610 = vmax.f32 %v594, 0.0
        %v611 = vmax.f32 %v595, 0.0
        %v612 = vmax.f32 %v596, 0.0
        %v613 = vmax.f32 %v597, 0.0
        %v614 = vmax.f32 %v598, 0.0
        %v615 = vmax.f32 %v599, 0.0
        %v616 = vmax.f32 %v600, 0.0
        %v617 = vmax.f32 %v601, 0.0
        %v618 = vmax.f32 %v602, 0.0
        %v619 = vmax.f32 %v603, 0.0
        %v620 = vmax.f32 %v604, 0.0
        %v621 = vmax.f32 %v605, 0.0
        %v622 = vmax.f32 %v606, 0.0
        %v623 = vmax.f32 %v607, 0.0
        %v624 = vmax.f32 %v608, 0.0
        %v625 = vld [vmem:[%s3] sm:$0x1]
        %v627 = vlaneseq
        %v628 = vshrl.u32 %v627, 7
        %v629 = vsub.s32 0, %v628
        %v630 = vrot.slane %v625, %v629
        %v632 = vmul.f32 %v609, %v630
        %v633 = vmul.f32 %v610, %v630
        %v634 = vmul.f32 %v611, %v630
        %v635 = vmul.f32 %v612, %v630
        %v636 = vmul.f32 %v613, %v630
        %v637 = vmul.f32 %v614, %v630
        %v638 = vmul.f32 %v615, %v630
        %v639 = vmul.f32 %v616, %v630
        %v640 = vmul.f32 %v617, %v630
        %v641 = vmul.f32 %v618, %v630
        %v642 = vmul.f32 %v619, %v630
        %v643 = vmul.f32 %v620, %v630
        %v644 = vmul.f32 %v621, %v630
        %v645 = vmul.f32 %v622, %v630
        %v646 = vmul.f32 %v623, %v630
        %v647 = vmul.f32 %v624, %v630
        %v648 = vsel %vm380, %v632, 0.0
        %649 = vadd.xlane.f32.xlu0 %v648
        %v650 = vpop.xlane.xlu0 %649
        %v651 = vsel %vm380, %v633, 0.0
        %652 = vadd.xlane.f32.xlu0 %v651
        %v653 = vpop.xlane.xlu0 %652
        %v654 = vsel %vm380, %v634, 0.0
        %655 = vadd.xlane.f32.xlu0 %v654
        %v656 = vpop.xlane.xlu0 %655
        %v657 = vsel %vm380, %v635, 0.0
        %658 = vadd.xlane.f32.xlu0 %v657
        %v659 = vpop.xlane.xlu0 %658
        %v660 = vsel %vm380, %v636, 0.0
        %661 = vadd.xlane.f32.xlu0 %v660
        %v662 = vpop.xlane.xlu0 %661
        %v663 = vsel %vm380, %v637, 0.0
        %664 = vadd.xlane.f32.xlu0 %v663
        %v665 = vpop.xlane.xlu0 %664
        %v666 = vsel %vm380, %v638, 0.0
        %667 = vadd.xlane.f32.xlu0 %v666
        %v668 = vpop.xlane.xlu0 %667
        %v669 = vsel %vm380, %v639, 0.0
        %670 = vadd.xlane.f32.xlu0 %v669
        %v671 = vpop.xlane.xlu0 %670
        %v672 = vsel %vm380, %v640, 0.0
        %673 = vadd.xlane.f32.xlu0 %v672
        %v674 = vpop.xlane.xlu0 %673
        %v675 = vsel %vm380, %v641, 0.0
        %676 = vadd.xlane.f32.xlu0 %v675
        %v677 = vpop.xlane.xlu0 %676
        %v678 = vsel %vm380, %v642, 0.0
        %679 = vadd.xlane.f32.xlu0 %v678
        %v680 = vpop.xlane.xlu0 %679
        %v681 = vsel %vm380, %v643, 0.0
        %682 = vadd.xlane.f32.xlu0 %v681
        %v683 = vpop.xlane.xlu0 %682
        %v684 = vsel %vm380, %v644, 0.0
        %685 = vadd.xlane.f32.xlu0 %v684
        %v686 = vpop.xlane.xlu0 %685
        %v687 = vsel %vm380, %v645, 0.0
        %688 = vadd.xlane.f32.xlu0 %v687
        %v689 = vpop.xlane.xlu0 %688
        %v690 = vsel %vm380, %v646, 0.0
        %691 = vadd.xlane.f32.xlu0 %v690
        %v692 = vpop.xlane.xlu0 %691
        %v693 = vsel %vm380, %v647, 0.0
        %694 = vadd.xlane.f32.xlu0 %v693
        %v695 = vpop.xlane.xlu0 %694
        %v712 = vlaneseq
        %v713 = vand.u32 %v712, 127
        %v714 = vlaneseq
        %v715 = vshrl.u32 %v714, 7
        %v716 = vsub.s32 %v713, %v715
        %v717 = vrot.slane %v650, %v716
        %v718 = vadd.s32 %v713, 4294967288
        %v719 = vlaneseq
        %v720 = vshrl.u32 %v719, 7
        %v721 = vsub.s32 %v718, %v720
        %v722 = vrot.slane %v653, %v721
        %vm723 = vcmask 130112
        %v724 = vsel %vm723, %v722, %v717
        %v725 = vlaneseq
        %v726 = vshrl.u32 %v725, 7
        %v727 = vsub.s32 %v713, %v726
        %v728 = vrot.slane %v656, %v727
        %v729 = vlaneseq
        %v730 = vshrl.u32 %v729, 7
        %v731 = vsub.s32 %v718, %v730
        %v732 = vrot.slane %v659, %v731
        %v733 = vsel %vm723, %v732, %v728
        %v734 = vlaneseq
        %v735 = vshrl.u32 %v734, 7
        %v736 = vsub.s32 %v713, %v735
        %v737 = vrot.slane %v662, %v736
        %v738 = vlaneseq
        %v739 = vshrl.u32 %v738, 7
        %v740 = vsub.s32 %v718, %v739
        %v741 = vrot.slane %v665, %v740
        %v742 = vsel %vm723, %v741, %v737
        %v743 = vlaneseq
        %v744 = vshrl.u32 %v743, 7
        %v745 = vsub.s32 %v713, %v744
        %v746 = vrot.slane %v668, %v745
        %v747 = vlaneseq
        %v748 = vshrl.u32 %v747, 7
        %v749 = vsub.s32 %v718, %v748
        %v750 = vrot.slane %v671, %v749
        %v751 = vsel %vm723, %v750, %v746
        %v752 = vlaneseq
        %v753 = vshrl.u32 %v752, 7
        %v754 = vsub.s32 %v713, %v753
        %v755 = vrot.slane %v674, %v754
        %v756 = vlaneseq
        %v757 = vshrl.u32 %v756, 7
        %v758 = vsub.s32 %v718, %v757
        %v759 = vrot.slane %v677, %v758
        %v760 = vsel %vm723, %v759, %v755
        %v761 = vlaneseq
        %v762 = vshrl.u32 %v761, 7
        %v763 = vsub.s32 %v713, %v762
        %v764 = vrot.slane %v680, %v763
        %v765 = vlaneseq
        %v766 = vshrl.u32 %v765, 7
        %v767 = vsub.s32 %v718, %v766
        %v768 = vrot.slane %v683, %v767
        %v769 = vsel %vm723, %v768, %v764
        %v770 = vlaneseq
        %v771 = vshrl.u32 %v770, 7
        %v772 = vsub.s32 %v713, %v771
        %v773 = vrot.slane %v686, %v772
        %v774 = vlaneseq
        %v775 = vshrl.u32 %v774, 7
        %v776 = vsub.s32 %v718, %v775
        %v777 = vrot.slane %v689, %v776
        %v778 = vsel %vm723, %v777, %v773
        %v779 = vlaneseq
        %v780 = vshrl.u32 %v779, 7
        %v781 = vsub.s32 %v713, %v780
        %v782 = vrot.slane %v692, %v781
        %v783 = vlaneseq
        %v784 = vshrl.u32 %v783, 7
        %v785 = vsub.s32 %v718, %v784
        %v786 = vrot.slane %v695, %v785
        %v787 = vsel %vm723, %v786, %v782
        %vm788 = vcmask 1041409
        %v789 = vsel %vm788, %v733, %v724
        %vm790 = vcmask 1042434
        %v791 = vsel %vm790, %v742, %v789
        %vm792 = vcmask 1043459
        %v793 = vsel %vm792, %v751, %v791
        %vm794 = vcmask 1044484
        %v795 = vsel %vm794, %v760, %v793
        %vm796 = vcmask 1045509
        %v797 = vsel %vm796, %v769, %v795
        %vm798 = vcmask 1046534
        %v799 = vsel %vm798, %v778, %v797
        %vm800 = vcmask 1047559
        %v801 = vsel %vm800, %v787, %v799
        %vm803 = vcmask 130048
        %v804 = vsel %vm803, %v801, -inf
        %805 = vmax.xlane.f32.xlu0 %v804
        %v806 = vpop.xlane.xlu0 %805
        %v808 = vlaneseq
        %v809 = vshrl.u32 %v808, 7
        %v810 = vsub.s32 0, %v809
        %v811 = vrot.slane %v806, %v810
        %v812 = vlaneseq
        %v813 = vshrl.u32 %v812, 7
        %v814 = vsub.s32 1, %v813
        %v815 = vrot.slane %v806, %v814
        %v816 = vlaneseq
        %v817 = vshrl.u32 %v816, 7
        %v818 = vsub.s32 2, %v817
        %v819 = vrot.slane %v806, %v818
        %v820 = vlaneseq
        %v821 = vshrl.u32 %v820, 7
        %v822 = vsub.s32 3, %v821
        %v823 = vrot.slane %v806, %v822
        %v824 = vlaneseq
        %v825 = vshrl.u32 %v824, 7
        %v826 = vsub.s32 4, %v825
        %v827 = vrot.slane %v806, %v826
        %v828 = vlaneseq
        %v829 = vshrl.u32 %v828, 7
        %v830 = vsub.s32 5, %v829
        %v831 = vrot.slane %v806, %v830
        %v832 = vlaneseq
        %v833 = vshrl.u32 %v832, 7
        %v834 = vsub.s32 6, %v833
        %v835 = vrot.slane %v806, %v834
        %v836 = vlaneseq
        %v837 = vshrl.u32 %v836, 7
        %v838 = vsub.s32 7, %v837
        %v839 = vrot.slane %v806, %v838
        %v848 = vsub.f32 %v650, %v811
        %v849 = vsub.f32 %v653, %v811
        %v850 = vsub.f32 %v656, %v815
        %v851 = vsub.f32 %v659, %v815
        %v852 = vsub.f32 %v662, %v819
        %v853 = vsub.f32 %v665, %v819
        %v854 = vsub.f32 %v668, %v823
        %v855 = vsub.f32 %v671, %v823
        %v856 = vsub.f32 %v674, %v827
        %v857 = vsub.f32 %v677, %v827
        %v858 = vsub.f32 %v680, %v831
        %v859 = vsub.f32 %v683, %v831
        %v860 = vsub.f32 %v686, %v835
        %v861 = vsub.f32 %v689, %v835
        %v862 = vsub.f32 %v692, %v839
        %v863 = vsub.f32 %v695, %v839
        %v864 = vmul.f32 %v848, 1.442695
        %v865 = vpow.pop %v864
        %v866 = vmul.f32 %v849, 1.442695
        %v867 = vpow.pop %v866
        %v868 = vmul.f32 %v850, 1.442695
        %v869 = vpow.pop %v868
        %v870 = vmul.f32 %v851, 1.442695
        %v871 = vpow.pop %v870
        %v872 = vmul.f32 %v852, 1.442695
        %v873 = vpow.pop %v872
        %v874 = vmul.f32 %v853, 1.442695
        %v875 = vpow.pop %v874
        %v876 = vmul.f32 %v854, 1.442695
        %v877 = vpow.pop %v876
        %v878 = vmul.f32 %v855, 1.442695
        %v879 = vpow.pop %v878
        %v880 = vmul.f32 %v856, 1.442695
        %v881 = vpow.pop %v880
        %v882 = vmul.f32 %v857, 1.442695
        %v883 = vpow.pop %v882
        %v884 = vmul.f32 %v858, 1.442695
        %v885 = vpow.pop %v884
        %v886 = vmul.f32 %v859, 1.442695
        %v887 = vpow.pop %v886
        %v888 = vmul.f32 %v860, 1.442695
        %v889 = vpow.pop %v888
        %v890 = vmul.f32 %v861, 1.442695
        %v891 = vpow.pop %v890
        %v892 = vmul.f32 %v862, 1.442695
        %v893 = vpow.pop %v892
        %v894 = vmul.f32 %v863, 1.442695
        %v895 = vpow.pop %v894
        %912 = vset.pattern.permute.xlu0 0
        %913 = vperm.xlu0 %912, %v865
        %v914 = vpop.permute.xlu0 %913
        %915 = vset.pattern.permute.xlu0 0
        %916 = vperm.xlu0 %915, %v867
        %v917 = vpop.permute.xlu0 %916
        %918 = vset.pattern.permute.xlu0 0
        %919 = vperm.xlu0 %918, %v869
        %v920 = vpop.permute.xlu0 %919
        %921 = vset.pattern.permute.xlu0 0
        %922 = vperm.xlu0 %921, %v871
        %v923 = vpop.permute.xlu0 %922
        %924 = vset.pattern.permute.xlu0 0
        %925 = vperm.xlu0 %924, %v873
        %v926 = vpop.permute.xlu0 %925
        %927 = vset.pattern.permute.xlu0 0
        %928 = vperm.xlu0 %927, %v875
        %v929 = vpop.permute.xlu0 %928
        %930 = vset.pattern.permute.xlu0 0
        %931 = vperm.xlu0 %930, %v877
        %v932 = vpop.permute.xlu0 %931
        %933 = vset.pattern.permute.xlu0 0
        %934 = vperm.xlu0 %933, %v879
        %v935 = vpop.permute.xlu0 %934
        %936 = vset.pattern.permute.xlu0 0
        %937 = vperm.xlu0 %936, %v881
        %v938 = vpop.permute.xlu0 %937
        %939 = vset.pattern.permute.xlu0 0
        %940 = vperm.xlu0 %939, %v883
        %v941 = vpop.permute.xlu0 %940
        %942 = vset.pattern.permute.xlu0 0
        %943 = vperm.xlu0 %942, %v885
        %v944 = vpop.permute.xlu0 %943
        %945 = vset.pattern.permute.xlu0 0
        %946 = vperm.xlu0 %945, %v887
        %v947 = vpop.permute.xlu0 %946
        %948 = vset.pattern.permute.xlu0 0
        %949 = vperm.xlu0 %948, %v889
        %v950 = vpop.permute.xlu0 %949
        %951 = vset.pattern.permute.xlu0 0
        %952 = vperm.xlu0 %951, %v891
        %v953 = vpop.permute.xlu0 %952
        %954 = vset.pattern.permute.xlu0 0
        %955 = vperm.xlu0 %954, %v893
        %v956 = vpop.permute.xlu0 %955
        %957 = vset.pattern.permute.xlu0 0
        %958 = vperm.xlu0 %957, %v895
        %v959 = vpop.permute.xlu0 %958
        %v960 = vlaneseq
        %v961 = vshrl.u32 %v960, 7
        %v962 = vsub.s32 %v713, %v961
        %v963 = vrot.slane %v914, %v962
        %v964 = vlaneseq
        %v965 = vshrl.u32 %v964, 7
        %v966 = vsub.s32 %v718, %v965
        %v967 = vrot.slane %v917, %v966
        %v968 = vsel %vm723, %v967, %v963
        %v969 = vlaneseq
        %v970 = vshrl.u32 %v969, 7
        %v971 = vsub.s32 %v713, %v970
        %v972 = vrot.slane %v920, %v971
        %v973 = vlaneseq
        %v974 = vshrl.u32 %v973, 7
        %v975 = vsub.s32 %v718, %v974
        %v976 = vrot.slane %v923, %v975
        %v977 = vsel %vm723, %v976, %v972
        %v978 = vlaneseq
        %v979 = vshrl.u32 %v978, 7
        %v980 = vsub.s32 %v713, %v979
        %v981 = vrot.slane %v926, %v980
        %v982 = vlaneseq
        %v983 = vshrl.u32 %v982, 7
        %v984 = vsub.s32 %v718, %v983
        %v985 = vrot.slane %v929, %v984
        %v986 = vsel %vm723, %v985, %v981
        %v987 = vlaneseq
        %v988 = vshrl.u32 %v987, 7
        %v989 = vsub.s32 %v713, %v988
        %v990 = vrot.slane %v932, %v989
        %v991 = vlaneseq
        %v992 = vshrl.u32 %v991, 7
        %v993 = vsub.s32 %v718, %v992
        %v994 = vrot.slane %v935, %v993
        %v995 = vsel %vm723, %v994, %v990
        %v996 = vlaneseq
        %v997 = vshrl.u32 %v996, 7
        %v998 = vsub.s32 %v713, %v997
        %v999 = vrot.slane %v938, %v998
        %v1000 = vlaneseq
        %v1001 = vshrl.u32 %v1000, 7
        %v1002 = vsub.s32 %v718, %v1001
        %v1003 = vrot.slane %v941, %v1002
        %v1004 = vsel %vm723, %v1003, %v999
        %v1005 = vlaneseq
        %v1006 = vshrl.u32 %v1005, 7
        %v1007 = vsub.s32 %v713, %v1006
        %v1008 = vrot.slane %v944, %v1007
        %v1009 = vlaneseq
        %v1010 = vshrl.u32 %v1009, 7
        %v1011 = vsub.s32 %v718, %v1010
        %v1012 = vrot.slane %v947, %v1011
        %v1013 = vsel %vm723, %v1012, %v1008
        %v1014 = vlaneseq
        %v1015 = vshrl.u32 %v1014, 7
        %v1016 = vsub.s32 %v713, %v1015
        %v1017 = vrot.slane %v950, %v1016
        %v1018 = vlaneseq
        %v1019 = vshrl.u32 %v1018, 7
        %v1020 = vsub.s32 %v718, %v1019
        %v1021 = vrot.slane %v953, %v1020
        %v1022 = vsel %vm723, %v1021, %v1017
        %v1023 = vlaneseq
        %v1024 = vshrl.u32 %v1023, 7
        %v1025 = vsub.s32 %v713, %v1024
        %v1026 = vrot.slane %v956, %v1025
        %v1027 = vlaneseq
        %v1028 = vshrl.u32 %v1027, 7
        %v1029 = vsub.s32 %v718, %v1028
        %v1030 = vrot.slane %v959, %v1029
        %v1031 = vsel %vm723, %v1030, %v1026
        %v1032 = vsel %vm788, %v977, %v968
        %v1033 = vsel %vm790, %v986, %v1032
        %v1034 = vsel %vm792, %v995, %v1033
        %v1035 = vsel %vm794, %v1004, %v1034
        %v1036 = vsel %vm796, %v1013, %v1035
        %v1037 = vsel %vm798, %v1022, %v1036
        %v1038 = vsel %vm800, %v1031, %v1037
        %v1040 = vsel %vm803, %v1038, 0.0
        %1041 = vadd.xlane.f32.xlu0 %v1040
        %v1042 = vpop.xlane.xlu0 %1041
        %v1043 = vrcp.pop %v1042
        %v1045 = vlaneseq
        %v1046 = vshrl.u32 %v1045, 7
        %v1047 = vsub.s32 0, %v1046
        %v1048 = vrot.slane %v1043, %v1047
        %v1049 = vlaneseq
        %v1050 = vshrl.u32 %v1049, 7
        %v1051 = vsub.s32 1, %v1050
        %v1052 = vrot.slane %v1043, %v1051
        %v1053 = vlaneseq
        %v1054 = vshrl.u32 %v1053, 7
        %v1055 = vsub.s32 2, %v1054
        %v1056 = vrot.slane %v1043, %v1055
        %v1057 = vlaneseq
        %v1058 = vshrl.u32 %v1057, 7
        %v1059 = vsub.s32 3, %v1058
        %v1060 = vrot.slane %v1043, %v1059
        %v1061 = vlaneseq
        %v1062 = vshrl.u32 %v1061, 7
        %v1063 = vsub.s32 4, %v1062
        %v1064 = vrot.slane %v1043, %v1063
        %v1065 = vlaneseq
        %v1066 = vshrl.u32 %v1065, 7
        %v1067 = vsub.s32 5, %v1066
        %v1068 = vrot.slane %v1043, %v1067
        %v1069 = vlaneseq
        %v1070 = vshrl.u32 %v1069, 7
        %v1071 = vsub.s32 6, %v1070
        %v1072 = vrot.slane %v1043, %v1071
        %v1073 = vlaneseq
        %v1074 = vshrl.u32 %v1073, 7
        %v1075 = vsub.s32 7, %v1074
        %v1076 = vrot.slane %v1043, %v1075
        %v1085 = vmul.f32 %v865, %v1048
        %v1086 = vmul.f32 %v867, %v1048
        %v1087 = vmul.f32 %v869, %v1052
        %v1088 = vmul.f32 %v871, %v1052
        %v1089 = vmul.f32 %v873, %v1056
        %v1090 = vmul.f32 %v875, %v1056
        %v1091 = vmul.f32 %v877, %v1060
        %v1092 = vmul.f32 %v879, %v1060
        %v1093 = vmul.f32 %v881, %v1064
        %v1094 = vmul.f32 %v883, %v1064
        %v1095 = vmul.f32 %v885, %v1068
        %v1096 = vmul.f32 %v887, %v1068
        %v1097 = vmul.f32 %v889, %v1072
        %v1098 = vmul.f32 %v891, %v1072
        %v1099 = vmul.f32 %v893, %v1076
        %v1100 = vmul.f32 %v895, %v1076
        %v1101 = vpack.c.bf16 %v1086, %v1085
        %v1102 = vpack.c.bf16 %v1088, %v1087
        %v1103 = vpack.c.bf16 %v1090, %v1089
        %v1104 = vpack.c.bf16 %v1092, %v1091
        %v1105 = vpack.c.bf16 %v1094, %v1093
        %v1106 = vpack.c.bf16 %v1096, %v1095
        %v1107 = vpack.c.bf16 %v1098, %v1097
        %v1108 = vpack.c.bf16 %v1100, %v1099
        %v1110 = vunpack.c.l.b16 %v1101
        %v1111 = vunpack.c.h.b16 %v1101
        %1112 = vset.pattern.permute.xlu0 0
        %1113 = vperm.xlu0 %1112, %v1110
        %v1114 = vpop.permute.xlu0 %1113
        %1115 = vset.pattern.permute.xlu0 0
        %1116 = vperm.xlu0 %1115, %v1111
        %v1117 = vpop.permute.xlu0 %1116
        %v1118 = vlaneseq
        %v1119 = vshrl.u32 %v1118, 7
        %v1120 = vsub.s32 %v713, %v1119
        %v1121 = vrot.slane %v1114, %v1120
        %v1122 = vlaneseq
        %v1123 = vshrl.u32 %v1122, 7
        %v1124 = vsub.s32 %v718, %v1123
        %v1125 = vrot.slane %v1117, %v1124
        %v1126 = vsel %vm723, %v1125, %v1121
        %v1127 = vpack.c.b16 %v1126, %v1126
        %v1130 = vsel %vm803, %v1127, 0
        %1132 = vmatprep.subr.bf16.mxu0 0
        %1133 = vmatpush1.bf16.msra.mxu0 %v360
        %1134 = vmatprep.subr.bf16.mxu0 0
        %1135 = vmatpush1.bf16.msra.mxu0 0
        %1136 = vmatprep.subr.bf16.mxu0 0
        %1137 = vmatpush1.bf16.msra.mxu0 0
        %1138 = vmatprep.subr.bf16.mxu0 0
        %1139 = vmatpush1.bf16.msra.mxu0 0
        %1140 = vmatprep.subr.bf16.mxu0 0
        %1141 = vmatpush1.bf16.msra.mxu0 0
        %1142 = vmatprep.subr.bf16.mxu0 0
        %1143 = vmatpush1.bf16.msra.mxu0 0
        %1144 = vmatprep.subr.bf16.mxu0 0
        %1145 = vmatpush1.bf16.msra.mxu0 0
        %1146 = vmatprep.subr.bf16.mxu0 0
        %1147 = vmatpush1.bf16.msra.mxu0 0
        %1148 = vmatprep.subr.bf16.mxu0 0
        %1149 = vmatpush1.bf16.msra.mxu0 0
        %1150 = vmatprep.subr.bf16.mxu0 0
        %1151 = vmatpush1.bf16.msra.mxu0 0
        %1152 = vmatprep.subr.bf16.mxu0 0
        %1153 = vmatpush1.bf16.msra.mxu0 0
        %1154 = vmatprep.subr.bf16.mxu0 0
        %1155 = vmatpush1.bf16.msra.mxu0 0
        %1156 = vmatprep.subr.bf16.mxu0 0
        %1157 = vmatpush1.bf16.msra.mxu0 0
        %1158 = vmatprep.subr.bf16.mxu0 0
        %1159 = vmatpush1.bf16.msra.mxu0 0
        %1160 = vmatprep.subr.bf16.mxu0 0
        %1161 = vmatpush1.bf16.msra.mxu0 0
        %1162 = vmatprep.subr.bf16.mxu0 0
        %1163 = vmatpush1.bf16.msra.mxu0 0
        %1164 = vmatprep.mubr.bf16.mxu0 0
        %1165 = vmatmul.mubr.bf16.gmra.mrb[0].mxu0 %v1130
        %v1166 = vpop.f32.mrb[0].mxu0
        %v1167 = vadd.f32 0.0, %v1166
        %v1168 = vpop.f32.mrb[0].mxu0
        %v1169 = vpop.f32.mrb[0].mxu0
        %v1170 = vpop.f32.mrb[0].mxu0
        %1171 = vdwg.mxu0
        %v1173 = vunpack.c.l.b16 %v1102
        %v1174 = vunpack.c.h.b16 %v1102
        %1175 = vset.pattern.permute.xlu0 0
        %1176 = vperm.xlu0 %1175, %v1173
        %v1177 = vpop.permute.xlu0 %1176
        %1178 = vset.pattern.permute.xlu0 0
        %1179 = vperm.xlu0 %1178, %v1174
        %v1180 = vpop.permute.xlu0 %1179
        %v1181 = vlaneseq
        %v1182 = vshrl.u32 %v1181, 7
        %v1183 = vsub.s32 %v713, %v1182
        %v1184 = vrot.slane %v1177, %v1183
        %v1185 = vlaneseq
        %v1186 = vshrl.u32 %v1185, 7
        %v1187 = vsub.s32 %v718, %v1186
        %v1188 = vrot.slane %v1180, %v1187
        %v1189 = vsel %vm723, %v1188, %v1184
        %v1190 = vpack.c.b16 %v1189, %v1189
        %v1193 = vsel %vm803, %v1190, 0
        %1195 = vmatprep.subr.bf16.mxu0 0
        %1196 = vmatpush1.bf16.msra.mxu0 %v361
        %1197 = vmatprep.subr.bf16.mxu0 0
        %1198 = vmatpush1.bf16.msra.mxu0 0
        %1199 = vmatprep.subr.bf16.mxu0 0
        %1200 = vmatpush1.bf16.msra.mxu0 0
        %1201 = vmatprep.subr.bf16.mxu0 0
        %1202 = vmatpush1.bf16.msra.mxu0 0
        %1203 = vmatprep.subr.bf16.mxu0 0
        %1204 = vmatpush1.bf16.msra.mxu0 0
        %1205 = vmatprep.subr.bf16.mxu0 0
        %1206 = vmatpush1.bf16.msra.mxu0 0
        %1207 = vmatprep.subr.bf16.mxu0 0
        %1208 = vmatpush1.bf16.msra.mxu0 0
        %1209 = vmatprep.subr.bf16.mxu0 0
        %1210 = vmatpush1.bf16.msra.mxu0 0
        %1211 = vmatprep.subr.bf16.mxu0 0
        %1212 = vmatpush1.bf16.msra.mxu0 0
        %1213 = vmatprep.subr.bf16.mxu0 0
        %1214 = vmatpush1.bf16.msra.mxu0 0
        %1215 = vmatprep.subr.bf16.mxu0 0
        %1216 = vmatpush1.bf16.msra.mxu0 0
        %1217 = vmatprep.subr.bf16.mxu0 0
        %1218 = vmatpush1.bf16.msra.mxu0 0
        %1219 = vmatprep.subr.bf16.mxu0 0
        %1220 = vmatpush1.bf16.msra.mxu0 0
        %1221 = vmatprep.subr.bf16.mxu0 0
        %1222 = vmatpush1.bf16.msra.mxu0 0
        %1223 = vmatprep.subr.bf16.mxu0 0
        %1224 = vmatpush1.bf16.msra.mxu0 0
        %1225 = vmatprep.subr.bf16.mxu0 0
        %1226 = vmatpush1.bf16.msra.mxu0 0
        %1227 = vmatprep.mubr.bf16.mxu0 0
        %1228 = vmatmul.mubr.bf16.gmra.mrb[0].mxu0 %v1193
        %v1229 = vpop.f32.mrb[0].mxu0
        %v1230 = vadd.f32 0.0, %v1229
        %v1231 = vpop.f32.mrb[0].mxu0
        %v1232 = vpop.f32.mrb[0].mxu0
        %v1233 = vpop.f32.mrb[0].mxu0
        %1234 = vdwg.mxu0
        %v1236 = vunpack.c.l.b16 %v1103
        %v1237 = vunpack.c.h.b16 %v1103
        %1238 = vset.pattern.permute.xlu0 0
        %1239 = vperm.xlu0 %1238, %v1236
        %v1240 = vpop.permute.xlu0 %1239
        %1241 = vset.pattern.permute.xlu0 0
        %1242 = vperm.xlu0 %1241, %v1237
        %v1243 = vpop.permute.xlu0 %1242
        %v1244 = vlaneseq
        %v1245 = vshrl.u32 %v1244, 7
        %v1246 = vsub.s32 %v713, %v1245
        %v1247 = vrot.slane %v1240, %v1246
        %v1248 = vlaneseq
        %v1249 = vshrl.u32 %v1248, 7
        %v1250 = vsub.s32 %v718, %v1249
        %v1251 = vrot.slane %v1243, %v1250
        %v1252 = vsel %vm723, %v1251, %v1247
        %v1253 = vpack.c.b16 %v1252, %v1252
        %v1256 = vsel %vm803, %v1253, 0
        %1258 = vmatprep.subr.bf16.mxu0 0
        %1259 = vmatpush1.bf16.msra.mxu0 %v362
        %1260 = vmatprep.subr.bf16.mxu0 0
        %1261 = vmatpush1.bf16.msra.mxu0 0
        %1262 = vmatprep.subr.bf16.mxu0 0
        %1263 = vmatpush1.bf16.msra.mxu0 0
        %1264 = vmatprep.subr.bf16.mxu0 0
        %1265 = vmatpush1.bf16.msra.mxu0 0
        %1266 = vmatprep.subr.bf16.mxu0 0
        %1267 = vmatpush1.bf16.msra.mxu0 0
        %1268 = vmatprep.subr.bf16.mxu0 0
        %1269 = vmatpush1.bf16.msra.mxu0 0
        %1270 = vmatprep.subr.bf16.mxu0 0
        %1271 = vmatpush1.bf16.msra.mxu0 0
        %1272 = vmatprep.subr.bf16.mxu0 0
        %1273 = vmatpush1.bf16.msra.mxu0 0
        %1274 = vmatprep.subr.bf16.mxu0 0
        %1275 = vmatpush1.bf16.msra.mxu0 0
        %1276 = vmatprep.subr.bf16.mxu0 0
        %1277 = vmatpush1.bf16.msra.mxu0 0
        %1278 = vmatprep.subr.bf16.mxu0 0
        %1279 = vmatpush1.bf16.msra.mxu0 0
        %1280 = vmatprep.subr.bf16.mxu0 0
        %1281 = vmatpush1.bf16.msra.mxu0 0
        %1282 = vmatprep.subr.bf16.mxu0 0
        %1283 = vmatpush1.bf16.msra.mxu0 0
        %1284 = vmatprep.subr.bf16.mxu0 0
        %1285 = vmatpush1.bf16.msra.mxu0 0
        %1286 = vmatprep.subr.bf16.mxu0 0
        %1287 = vmatpush1.bf16.msra.mxu0 0
        %1288 = vmatprep.subr.bf16.mxu0 0
        %1289 = vmatpush1.bf16.msra.mxu0 0
        %1290 = vmatprep.mubr.bf16.mxu0 0
        %1291 = vmatmul.mubr.bf16.gmra.mrb[0].mxu0 %v1256
        %v1292 = vpop.f32.mrb[0].mxu0
        %v1293 = vadd.f32 0.0, %v1292
        %v1294 = vpop.f32.mrb[0].mxu0
        %v1295 = vpop.f32.mrb[0].mxu0
        %v1296 = vpop.f32.mrb[0].mxu0
        %1297 = vdwg.mxu0
        %v1299 = vunpack.c.l.b16 %v1104
        %v1300 = vunpack.c.h.b16 %v1104
        %1301 = vset.pattern.permute.xlu0 0
        %1302 = vperm.xlu0 %1301, %v1299
        %v1303 = vpop.permute.xlu0 %1302
        %1304 = vset.pattern.permute.xlu0 0
        %1305 = vperm.xlu0 %1304, %v1300
        %v1306 = vpop.permute.xlu0 %1305
        %v1307 = vlaneseq
        %v1308 = vshrl.u32 %v1307, 7
        %v1309 = vsub.s32 %v713, %v1308
        %v1310 = vrot.slane %v1303, %v1309
        %v1311 = vlaneseq
        %v1312 = vshrl.u32 %v1311, 7
        %v1313 = vsub.s32 %v718, %v1312
        %v1314 = vrot.slane %v1306, %v1313
        %v1315 = vsel %vm723, %v1314, %v1310
        %v1316 = vpack.c.b16 %v1315, %v1315
        %v1319 = vsel %vm803, %v1316, 0
        %1321 = vmatprep.subr.bf16.mxu0 0
        %1322 = vmatpush1.bf16.msra.mxu0 %v363
        %1323 = vmatprep.subr.bf16.mxu0 0
        %1324 = vmatpush1.bf16.msra.mxu0 0
        %1325 = vmatprep.subr.bf16.mxu0 0
        %1326 = vmatpush1.bf16.msra.mxu0 0
        %1327 = vmatprep.subr.bf16.mxu0 0
        %1328 = vmatpush1.bf16.msra.mxu0 0
        %1329 = vmatprep.subr.bf16.mxu0 0
        %1330 = vmatpush1.bf16.msra.mxu0 0
        %1331 = vmatprep.subr.bf16.mxu0 0
        %1332 = vmatpush1.bf16.msra.mxu0 0
        %1333 = vmatprep.subr.bf16.mxu0 0
        %1334 = vmatpush1.bf16.msra.mxu0 0
        %1335 = vmatprep.subr.bf16.mxu0 0
        %1336 = vmatpush1.bf16.msra.mxu0 0
        %1337 = vmatprep.subr.bf16.mxu0 0
        %1338 = vmatpush1.bf16.msra.mxu0 0
        %1339 = vmatprep.subr.bf16.mxu0 0
        %1340 = vmatpush1.bf16.msra.mxu0 0
        %1341 = vmatprep.subr.bf16.mxu0 0
        %1342 = vmatpush1.bf16.msra.mxu0 0
        %1343 = vmatprep.subr.bf16.mxu0 0
        %1344 = vmatpush1.bf16.msra.mxu0 0
        %1345 = vmatprep.subr.bf16.mxu0 0
        %1346 = vmatpush1.bf16.msra.mxu0 0
        %1347 = vmatprep.subr.bf16.mxu0 0
        %1348 = vmatpush1.bf16.msra.mxu0 0
        %1349 = vmatprep.subr.bf16.mxu0 0
        %1350 = vmatpush1.bf16.msra.mxu0 0
        %1351 = vmatprep.subr.bf16.mxu0 0
        %1352 = vmatpush1.bf16.msra.mxu0 0
        %1353 = vmatprep.mubr.bf16.mxu0 0
        %1354 = vmatmul.mubr.bf16.gmra.mrb[0].mxu0 %v1319
        %v1355 = vpop.f32.mrb[0].mxu0
        %v1356 = vadd.f32 0.0, %v1355
        %v1357 = vpop.f32.mrb[0].mxu0
        %v1358 = vpop.f32.mrb[0].mxu0
        %v1359 = vpop.f32.mrb[0].mxu0
        %1360 = vdwg.mxu0
        %v1362 = vunpack.c.l.b16 %v1105
        %v1363 = vunpack.c.h.b16 %v1105
        %1364 = vset.pattern.permute.xlu0 0
        %1365 = vperm.xlu0 %1364, %v1362
        %v1366 = vpop.permute.xlu0 %1365
        %1367 = vset.pattern.permute.xlu0 0
        %1368 = vperm.xlu0 %1367, %v1363
        %v1369 = vpop.permute.xlu0 %1368
        %v1370 = vlaneseq
        %v1371 = vshrl.u32 %v1370, 7
        %v1372 = vsub.s32 %v713, %v1371
        %v1373 = vrot.slane %v1366, %v1372
        %v1374 = vlaneseq
        %v1375 = vshrl.u32 %v1374, 7
        %v1376 = vsub.s32 %v718, %v1375
        %v1377 = vrot.slane %v1369, %v1376
        %v1378 = vsel %vm723, %v1377, %v1373
        %v1379 = vpack.c.b16 %v1378, %v1378
        %v1382 = vsel %vm803, %v1379, 0
        %1384 = vmatprep.subr.bf16.mxu0 0
        %1385 = vmatpush1.bf16.msra.mxu0 %v364
        %1386 = vmatprep.subr.bf16.mxu0 0
        %1387 = vmatpush1.bf16.msra.mxu0 0
        %1388 = vmatprep.subr.bf16.mxu0 0
        %1389 = vmatpush1.bf16.msra.mxu0 0
        %1390 = vmatprep.subr.bf16.mxu0 0
        %1391 = vmatpush1.bf16.msra.mxu0 0
        %1392 = vmatprep.subr.bf16.mxu0 0
        %1393 = vmatpush1.bf16.msra.mxu0 0
        %1394 = vmatprep.subr.bf16.mxu0 0
        %1395 = vmatpush1.bf16.msra.mxu0 0
        %1396 = vmatprep.subr.bf16.mxu0 0
        %1397 = vmatpush1.bf16.msra.mxu0 0
        %1398 = vmatprep.subr.bf16.mxu0 0
        %1399 = vmatpush1.bf16.msra.mxu0 0
        %1400 = vmatprep.subr.bf16.mxu0 0
        %1401 = vmatpush1.bf16.msra.mxu0 0
        %1402 = vmatprep.subr.bf16.mxu0 0
        %1403 = vmatpush1.bf16.msra.mxu0 0
        %1404 = vmatprep.subr.bf16.mxu0 0
        %1405 = vmatpush1.bf16.msra.mxu0 0
        %1406 = vmatprep.subr.bf16.mxu0 0
        %1407 = vmatpush1.bf16.msra.mxu0 0
        %1408 = vmatprep.subr.bf16.mxu0 0
        %1409 = vmatpush1.bf16.msra.mxu0 0
        %1410 = vmatprep.subr.bf16.mxu0 0
        %1411 = vmatpush1.bf16.msra.mxu0 0
        %1412 = vmatprep.subr.bf16.mxu0 0
        %1413 = vmatpush1.bf16.msra.mxu0 0
        %1414 = vmatprep.subr.bf16.mxu0 0
        %1415 = vmatpush1.bf16.msra.mxu0 0
        %1416 = vmatprep.mubr.bf16.mxu0 0
        %1417 = vmatmul.mubr.bf16.gmra.mrb[0].mxu0 %v1382
        %v1418 = vpop.f32.mrb[0].mxu0
        %v1419 = vadd.f32 0.0, %v1418
        %v1420 = vpop.f32.mrb[0].mxu0
        %v1421 = vpop.f32.mrb[0].mxu0
        %v1422 = vpop.f32.mrb[0].mxu0
        %1423 = vdwg.mxu0
        %v1425 = vunpack.c.l.b16 %v1106
        %v1426 = vunpack.c.h.b16 %v1106
        %1427 = vset.pattern.permute.xlu0 0
        %1428 = vperm.xlu0 %1427, %v1425
        %v1429 = vpop.permute.xlu0 %1428
        %1430 = vset.pattern.permute.xlu0 0
        %1431 = vperm.xlu0 %1430, %v1426
        %v1432 = vpop.permute.xlu0 %1431
        %v1433 = vlaneseq
        %v1434 = vshrl.u32 %v1433, 7
        %v1435 = vsub.s32 %v713, %v1434
        %v1436 = vrot.slane %v1429, %v1435
        %v1437 = vlaneseq
        %v1438 = vshrl.u32 %v1437, 7
        %v1439 = vsub.s32 %v718, %v1438
        %v1440 = vrot.slane %v1432, %v1439
        %v1441 = vsel %vm723, %v1440, %v1436
        %v1442 = vpack.c.b16 %v1441, %v1441
        %v1445 = vsel %vm803, %v1442, 0
        %1447 = vmatprep.subr.bf16.mxu0 0
        %1448 = vmatpush1.bf16.msra.mxu0 %v365
        %1449 = vmatprep.subr.bf16.mxu0 0
        %1450 = vmatpush1.bf16.msra.mxu0 0
        %1451 = vmatprep.subr.bf16.mxu0 0
        %1452 = vmatpush1.bf16.msra.mxu0 0
        %1453 = vmatprep.subr.bf16.mxu0 0
        %1454 = vmatpush1.bf16.msra.mxu0 0
        %1455 = vmatprep.subr.bf16.mxu0 0
        %1456 = vmatpush1.bf16.msra.mxu0 0
        %1457 = vmatprep.subr.bf16.mxu0 0
        %1458 = vmatpush1.bf16.msra.mxu0 0
        %1459 = vmatprep.subr.bf16.mxu0 0
        %1460 = vmatpush1.bf16.msra.mxu0 0
        %1461 = vmatprep.subr.bf16.mxu0 0
        %1462 = vmatpush1.bf16.msra.mxu0 0
        %1463 = vmatprep.subr.bf16.mxu0 0
        %1464 = vmatpush1.bf16.msra.mxu0 0
        %1465 = vmatprep.subr.bf16.mxu0 0
        %1466 = vmatpush1.bf16.msra.mxu0 0
        %1467 = vmatprep.subr.bf16.mxu0 0
        %1468 = vmatpush1.bf16.msra.mxu0 0
        %1469 = vmatprep.subr.bf16.mxu0 0
        %1470 = vmatpush1.bf16.msra.mxu0 0
        %1471 = vmatprep.subr.bf16.mxu0 0
        %1472 = vmatpush1.bf16.msra.mxu0 0
        %1473 = vmatprep.subr.bf16.mxu0 0
        %1474 = vmatpush1.bf16.msra.mxu0 0
        %1475 = vmatprep.subr.bf16.mxu0 0
        %1476 = vmatpush1.bf16.msra.mxu0 0
        %1477 = vmatprep.subr.bf16.mxu0 0
        %1478 = vmatpush1.bf16.msra.mxu0 0
        %1479 = vmatprep.mubr.bf16.mxu0 0
        %1480 = vmatmul.mubr.bf16.gmra.mrb[0].mxu0 %v1445
        %v1481 = vpop.f32.mrb[0].mxu0
        %v1482 = vadd.f32 0.0, %v1481
        %v1483 = vpop.f32.mrb[0].mxu0
        %v1484 = vpop.f32.mrb[0].mxu0
        %v1485 = vpop.f32.mrb[0].mxu0
        %1486 = vdwg.mxu0
        %v1488 = vunpack.c.l.b16 %v1107
        %v1489 = vunpack.c.h.b16 %v1107
        %1490 = vset.pattern.permute.xlu0 0
        %1491 = vperm.xlu0 %1490, %v1488
        %v1492 = vpop.permute.xlu0 %1491
        %1493 = vset.pattern.permute.xlu0 0
        %1494 = vperm.xlu0 %1493, %v1489
        %v1495 = vpop.permute.xlu0 %1494
        %v1496 = vlaneseq
        %v1497 = vshrl.u32 %v1496, 7
        %v1498 = vsub.s32 %v713, %v1497
        %v1499 = vrot.slane %v1492, %v1498
        %v1500 = vlaneseq
        %v1501 = vshrl.u32 %v1500, 7
        %v1502 = vsub.s32 %v718, %v1501
        %v1503 = vrot.slane %v1495, %v1502
        %v1504 = vsel %vm723, %v1503, %v1499
        %v1505 = vpack.c.b16 %v1504, %v1504
        %v1508 = vsel %vm803, %v1505, 0
        %1510 = vmatprep.subr.bf16.mxu0 0
        %1511 = vmatpush1.bf16.msra.mxu0 %v366
        %1512 = vmatprep.subr.bf16.mxu0 0
        %1513 = vmatpush1.bf16.msra.mxu0 0
        %1514 = vmatprep.subr.bf16.mxu0 0
        %1515 = vmatpush1.bf16.msra.mxu0 0
        %1516 = vmatprep.subr.bf16.mxu0 0
        %1517 = vmatpush1.bf16.msra.mxu0 0
        %1518 = vmatprep.subr.bf16.mxu0 0
        %1519 = vmatpush1.bf16.msra.mxu0 0
        %1520 = vmatprep.subr.bf16.mxu0 0
        %1521 = vmatpush1.bf16.msra.mxu0 0
        %1522 = vmatprep.subr.bf16.mxu0 0
        %1523 = vmatpush1.bf16.msra.mxu0 0
        %1524 = vmatprep.subr.bf16.mxu0 0
        %1525 = vmatpush1.bf16.msra.mxu0 0
        %1526 = vmatprep.subr.bf16.mxu0 0
        %1527 = vmatpush1.bf16.msra.mxu0 0
        %1528 = vmatprep.subr.bf16.mxu0 0
        %1529 = vmatpush1.bf16.msra.mxu0 0
        %1530 = vmatprep.subr.bf16.mxu0 0
        %1531 = vmatpush1.bf16.msra.mxu0 0
        %1532 = vmatprep.subr.bf16.mxu0 0
        %1533 = vmatpush1.bf16.msra.mxu0 0
        %1534 = vmatprep.subr.bf16.mxu0 0
        %1535 = vmatpush1.bf16.msra.mxu0 0
        %1536 = vmatprep.subr.bf16.mxu0 0
        %1537 = vmatpush1.bf16.msra.mxu0 0
        %1538 = vmatprep.subr.bf16.mxu0 0
        %1539 = vmatpush1.bf16.msra.mxu0 0
        %1540 = vmatprep.subr.bf16.mxu0 0
        %1541 = vmatpush1.bf16.msra.mxu0 0
        %1542 = vmatprep.mubr.bf16.mxu0 0
        %1543 = vmatmul.mubr.bf16.gmra.mrb[0].mxu0 %v1508
        %v1544 = vpop.f32.mrb[0].mxu0
        %v1545 = vadd.f32 0.0, %v1544
        %v1546 = vpop.f32.mrb[0].mxu0
        %v1547 = vpop.f32.mrb[0].mxu0
        %v1548 = vpop.f32.mrb[0].mxu0
        %1549 = vdwg.mxu0
        %v1551 = vunpack.c.l.b16 %v1108
        %v1552 = vunpack.c.h.b16 %v1108
        %1553 = vset.pattern.permute.xlu0 0
        %1554 = vperm.xlu0 %1553, %v1551
        %v1555 = vpop.permute.xlu0 %1554
        %1556 = vset.pattern.permute.xlu0 0
        %1557 = vperm.xlu0 %1556, %v1552
        %v1558 = vpop.permute.xlu0 %1557
        %v1559 = vlaneseq
        %v1560 = vshrl.u32 %v1559, 7
        %v1561 = vsub.s32 %v713, %v1560
        %v1562 = vrot.slane %v1555, %v1561
        %v1563 = vlaneseq
        %v1564 = vshrl.u32 %v1563, 7
        %v1565 = vsub.s32 %v718, %v1564
        %v1566 = vrot.slane %v1558, %v1565
        %v1567 = vsel %vm723, %v1566, %v1562
        %v1568 = vpack.c.b16 %v1567, %v1567
        %v1571 = vsel %vm803, %v1568, 0
        %1573 = vmatprep.subr.bf16.mxu0 0
        %1574 = vmatpush1.bf16.msra.mxu0 %v367
        %1575 = vmatprep.subr.bf16.mxu0 0
        %1576 = vmatpush1.bf16.msra.mxu0 0
        %1577 = vmatprep.subr.bf16.mxu0 0
        %1578 = vmatpush1.bf16.msra.mxu0 0
        %1579 = vmatprep.subr.bf16.mxu0 0
        %1580 = vmatpush1.bf16.msra.mxu0 0
        %1581 = vmatprep.subr.bf16.mxu0 0
        %1582 = vmatpush1.bf16.msra.mxu0 0
        %1583 = vmatprep.subr.bf16.mxu0 0
        %1584 = vmatpush1.bf16.msra.mxu0 0
        %1585 = vmatprep.subr.bf16.mxu0 0
        %1586 = vmatpush1.bf16.msra.mxu0 0
        %1587 = vmatprep.subr.bf16.mxu0 0
        %1588 = vmatpush1.bf16.msra.mxu0 0
        %1589 = vmatprep.subr.bf16.mxu0 0
        %1590 = vmatpush1.bf16.msra.mxu0 0
        %1591 = vmatprep.subr.bf16.mxu0 0
        %1592 = vmatpush1.bf16.msra.mxu0 0
        %1593 = vmatprep.subr.bf16.mxu0 0
        %1594 = vmatpush1.bf16.msra.mxu0 0
        %1595 = vmatprep.subr.bf16.mxu0 0
        %1596 = vmatpush1.bf16.msra.mxu0 0
        %1597 = vmatprep.subr.bf16.mxu0 0
        %1598 = vmatpush1.bf16.msra.mxu0 0
        %1599 = vmatprep.subr.bf16.mxu0 0
        %1600 = vmatpush1.bf16.msra.mxu0 0
        %1601 = vmatprep.subr.bf16.mxu0 0
        %1602 = vmatpush1.bf16.msra.mxu0 0
        %1603 = vmatprep.subr.bf16.mxu0 0
        %1604 = vmatpush1.bf16.msra.mxu0 0
        %1605 = vmatprep.mubr.bf16.mxu0 0
        %1606 = vmatmul.mubr.bf16.gmra.mrb[0].mxu0 %v1571
        %v1607 = vpop.f32.mrb[0].mxu0
        %v1608 = vadd.f32 0.0, %v1607
        %v1609 = vpop.f32.mrb[0].mxu0
        %v1610 = vpop.f32.mrb[0].mxu0
        %v1611 = vpop.f32.mrb[0].mxu0
        %1612 = vdwg.mxu0
        %v1621 = vrot.slane %v1230, 7
        %v1622 = vsel %vm788, %v1621, %v1167
        %v1623 = vrot.slane %v1293, 6
        %v1624 = vsel %vm790, %v1623, %v1622
        %v1625 = vrot.slane %v1356, 5
        %v1626 = vsel %vm792, %v1625, %v1624
        %v1627 = vrot.slane %v1419, 4
        %v1628 = vsel %vm794, %v1627, %v1626
        %v1629 = vrot.slane %v1482, 3
        %v1630 = vsel %vm796, %v1629, %v1628
        %v1631 = vrot.slane %v1545, 2
        %v1632 = vsel %vm798, %v1631, %v1630
        %v1633 = vrot.slane %v1608, 1
        %v1634 = vsel %vm800, %v1633, %v1632
        %1636 = vst.msk [vmem:[%s298] sm:$0xff] %vm380, %v1634
        %1653 = vset.pattern.permute.xlu0 0
        %1654 = vperm.xlu0 %1653, %v1085
        %v1655 = vpop.permute.xlu0 %1654
        %1656 = vset.pattern.permute.xlu0 0
        %1657 = vperm.xlu0 %1656, %v1086
        %v1658 = vpop.permute.xlu0 %1657
        %1659 = vset.pattern.permute.xlu0 0
        %1660 = vperm.xlu0 %1659, %v1087
        %v1661 = vpop.permute.xlu0 %1660
        %1662 = vset.pattern.permute.xlu0 0
        %1663 = vperm.xlu0 %1662, %v1088
        %v1664 = vpop.permute.xlu0 %1663
        %1665 = vset.pattern.permute.xlu0 0
        %1666 = vperm.xlu0 %1665, %v1089
        %v1667 = vpop.permute.xlu0 %1666
        %1668 = vset.pattern.permute.xlu0 0
        %1669 = vperm.xlu0 %1668, %v1090
        %v1670 = vpop.permute.xlu0 %1669
        %1671 = vset.pattern.permute.xlu0 0
        %1672 = vperm.xlu0 %1671, %v1091
        %v1673 = vpop.permute.xlu0 %1672
        %1674 = vset.pattern.permute.xlu0 0
        %1675 = vperm.xlu0 %1674, %v1092
        %v1676 = vpop.permute.xlu0 %1675
        %1677 = vset.pattern.permute.xlu0 0
        %1678 = vperm.xlu0 %1677, %v1093
        %v1679 = vpop.permute.xlu0 %1678
        %1680 = vset.pattern.permute.xlu0 0
        %1681 = vperm.xlu0 %1680, %v1094
        %v1682 = vpop.permute.xlu0 %1681
        %1683 = vset.pattern.permute.xlu0 0
        %1684 = vperm.xlu0 %1683, %v1095
        %v1685 = vpop.permute.xlu0 %1684
        %1686 = vset.pattern.permute.xlu0 0
        %1687 = vperm.xlu0 %1686, %v1096
        %v1688 = vpop.permute.xlu0 %1687
        %1689 = vset.pattern.permute.xlu0 0
        %1690 = vperm.xlu0 %1689, %v1097
        %v1691 = vpop.permute.xlu0 %1690
        %1692 = vset.pattern.permute.xlu0 0
        %1693 = vperm.xlu0 %1692, %v1098
        %v1694 = vpop.permute.xlu0 %1693
        %1695 = vset.pattern.permute.xlu0 0
        %1696 = vperm.xlu0 %1695, %v1099
        %v1697 = vpop.permute.xlu0 %1696
        %1698 = vset.pattern.permute.xlu0 0
        %1699 = vperm.xlu0 %1698, %v1100
        %v1700 = vpop.permute.xlu0 %1699
        %v1701 = vlaneseq
        %v1702 = vshrl.u32 %v1701, 7
        %v1703 = vsub.s32 %v713, %v1702
        %v1704 = vrot.slane %v1655, %v1703
        %v1705 = vlaneseq
        %v1706 = vshrl.u32 %v1705, 7
        %v1707 = vsub.s32 %v718, %v1706
        %v1708 = vrot.slane %v1658, %v1707
        %v1709 = vsel %vm723, %v1708, %v1704
        %v1710 = vlaneseq
        %v1711 = vshrl.u32 %v1710, 7
        %v1712 = vsub.s32 %v713, %v1711
        %v1713 = vrot.slane %v1661, %v1712
        %v1714 = vlaneseq
        %v1715 = vshrl.u32 %v1714, 7
        %v1716 = vsub.s32 %v718, %v1715
        %v1717 = vrot.slane %v1664, %v1716
        %v1718 = vsel %vm723, %v1717, %v1713
        %v1719 = vlaneseq
        %v1720 = vshrl.u32 %v1719, 7
        %v1721 = vsub.s32 %v713, %v1720
        %v1722 = vrot.slane %v1667, %v1721
        %v1723 = vlaneseq
        %v1724 = vshrl.u32 %v1723, 7
        %v1725 = vsub.s32 %v718, %v1724
        %v1726 = vrot.slane %v1670, %v1725
        %v1727 = vsel %vm723, %v1726, %v1722
        %v1728 = vlaneseq
        %v1729 = vshrl.u32 %v1728, 7
        %v1730 = vsub.s32 %v713, %v1729
        %v1731 = vrot.slane %v1673, %v1730
        %v1732 = vlaneseq
        %v1733 = vshrl.u32 %v1732, 7
        %v1734 = vsub.s32 %v718, %v1733
        %v1735 = vrot.slane %v1676, %v1734
        %v1736 = vsel %vm723, %v1735, %v1731
        %v1737 = vlaneseq
        %v1738 = vshrl.u32 %v1737, 7
        %v1739 = vsub.s32 %v713, %v1738
        %v1740 = vrot.slane %v1679, %v1739
        %v1741 = vlaneseq
        %v1742 = vshrl.u32 %v1741, 7
        %v1743 = vsub.s32 %v718, %v1742
        %v1744 = vrot.slane %v1682, %v1743
        %v1745 = vsel %vm723, %v1744, %v1740
        %v1746 = vlaneseq
        %v1747 = vshrl.u32 %v1746, 7
        %v1748 = vsub.s32 %v713, %v1747
        %v1749 = vrot.slane %v1685, %v1748
        %v1750 = vlaneseq
        %v1751 = vshrl.u32 %v1750, 7
        %v1752 = vsub.s32 %v718, %v1751
        %v1753 = vrot.slane %v1688, %v1752
        %v1754 = vsel %vm723, %v1753, %v1749
        %v1755 = vlaneseq
        %v1756 = vshrl.u32 %v1755, 7
        %v1757 = vsub.s32 %v713, %v1756
        %v1758 = vrot.slane %v1691, %v1757
        %v1759 = vlaneseq
        %v1760 = vshrl.u32 %v1759, 7
        %v1761 = vsub.s32 %v718, %v1760
        %v1762 = vrot.slane %v1694, %v1761
        %v1763 = vsel %vm723, %v1762, %v1758
        %v1764 = vlaneseq
        %v1765 = vshrl.u32 %v1764, 7
        %v1766 = vsub.s32 %v713, %v1765
        %v1767 = vrot.slane %v1697, %v1766
        %v1768 = vlaneseq
        %v1769 = vshrl.u32 %v1768, 7
        %v1770 = vsub.s32 %v718, %v1769
        %v1771 = vrot.slane %v1700, %v1770
        %v1772 = vsel %vm723, %v1771, %v1767
        %v1773 = vsel %vm788, %v1718, %v1709
        %v1774 = vsel %vm790, %v1727, %v1773
        %v1775 = vsel %vm792, %v1736, %v1774
        %v1776 = vsel %vm794, %v1745, %v1775
        %v1777 = vsel %vm796, %v1754, %v1776
        %v1778 = vsel %vm798, %v1763, %v1777
        %v1779 = vsel %vm800, %v1772, %v1778
        %1781 = vst.msk [vmem:[%s305] sm:$0xff] %vm803, %v1779
        %s1782 = sand.u32 %s131, 1
        %s1783 = scalar_lea.sflag [#allocation4], %s1782
        %s1784 = sand.u32 %s131, 1
        %s1785 = smul.addr %s1784, 8
        %s1786 = scalar_lea.vmem [#allocation8], %s1785
        %s1787 = sand.u32 %s157, 1
        %s1788 = scalar_lea.sflag [#allocation10], %s1787
        %s1789 = sand.u32 %s157, 1
        %s1790 = smul.addr %s1789, 8
        %s1791 = scalar_lea.vmem [#allocation9], %s1790
        // Predicated region
        $region49: #{tpu_custom_call.1} parent=35 // pred_check
          %p1792 = pneg %p141
        $region50: #{tpu_custom_call.1} parent=35 // pred_check_branch
          %1794 = sbr.rel (%p1792) target = $region52
        $region51: #{tpu_custom_call.1} parent=35 // pred_region
          %s1796 = ssub.s32 128, 128
          %1797 = vsyncadd %s1783, %s1796
          %s1798 = smul.addr %s29, 128
          %s1799 = scalar_lea.hbm %s4, %s1798
          %s1801 = sshll.u32 %s1786, 4
          %s1802 = int_to_ptr.vmem [resolvable:$true] %s1801
          %1804 = dma.vmem_to_hbm [thread:$0]  %s1802, 128, %s1799, %s1783
        $region52: #{tpu_custom_call.1} parent=35 // pred_fallthru
          _
        // Predicated region
        $region53: #{tpu_custom_call.1} parent=35 // pred_check
          %p1805 = pneg %p167
        $region54: #{tpu_custom_call.1} parent=35 // pred_check_branch
          %1807 = sbr.rel (%p1805) target = $region56
        $region55: #{tpu_custom_call.1} parent=35 // pred_region
          %s1809 = ssub.s32 128, 128
          %1810 = vsyncadd %s1788, %s1809
          %s1811 = smul.addr %s29, 128
          %s1812 = scalar_lea.hbm %s5, %s1811
          %s1814 = sshll.u32 %s1791, 4
          %s1815 = int_to_ptr.vmem [resolvable:$true] %s1814
          %1817 = dma.vmem_to_hbm [thread:$0]  %s1815, 128, %s1812, %s1788
        $region56: #{tpu_custom_call.1} parent=35 // pred_fallthru
          _
      $region36: #{tpu_custom_call.1} parent=5 // pred_fallthru
        _
      %p1818 = scmp.le.s32.totalorder 2, %s24
      // Predicated region
      $region57: #{tpu_custom_call.1} parent=5 // pred_check
        %p1819 = pneg %p1818
      $region58: #{tpu_custom_call.1} parent=5 // pred_check_branch
        %1821 = sbr.rel (%p1819) target = $region60
      $region59: #{tpu_custom_call.1} parent=5 // pred_region
        %s1822 = ssub.s32 %s24, 2
        // Predicated region
        $region61: #{tpu_custom_call.1} parent=59 // pred_check
          %p1823 = pneg %p147
        $region62: #{tpu_custom_call.1} parent=59 // pred_check_branch
          %1825 = sbr.rel (%p1823) target = $region64
        $region63: #{tpu_custom_call.1} parent=59 // pred_region
          %s1826 = sand.u32 %s132, 1
          %s1827 = scalar_lea.sflag [#allocation4], %s1826
          %s1828 = sand.u32 %s132, 1
          %s1829 = smul.addr %s1828, 8
          %s1830 = scalar_lea.vmem [#allocation8], %s1829
          %1831 = dma.done %s1827, 128
        $region64: #{tpu_custom_call.1} parent=59 // pred_fallthru
          _
        // Predicated region
        $region65: #{tpu_custom_call.1} parent=59 // pred_check
          %p1832 = pneg %p173
        $region66: #{tpu_custom_call.1} parent=59 // pred_check_branch
          %1834 = sbr.rel (%p1832) target = $region68
        $region67: #{tpu_custom_call.1} parent=59 // pred_region
          %s1835 = sand.u32 %s158, 1
          %s1836 = scalar_lea.sflag [#allocation10], %s1835
          %s1837 = sand.u32 %s158, 1
          %s1838 = smul.addr %s1837, 8
          %s1839 = scalar_lea.vmem [#allocation9], %s1838
          %1840 = dma.done %s1836, 128
        $region68: #{tpu_custom_call.1} parent=59 // pred_fallthru
          _
      $region60: #{tpu_custom_call.1} parent=5 // pred_fallthru
        _
    $region6: #{tpu_custom_call.1} parent=1 // loop_footer
      %s28 = sadd.s32 1, %s24
    $region7: #{tpu_custom_call.1} parent=1 // loop_footer_branch
      %23 = sbr.rel target = $region3
    $region8: #{tpu_custom_call.1} parent=1 // loop_exit
      _
    %1841 = vsyncpa [#allocation3], 1
    %s1842 = scalar_lea.sflag [#allocation3], 1
    %1843 = vsyncpa %s1842, 1
    %1844 = vsyncpa [#allocation6], 1
    %s1845 = scalar_lea.sflag [#allocation6], 1
    %1846 = vsyncpa %s1845, 1
    %1847 = vsyncpa [#allocation4], 1
    %s1848 = scalar_lea.sflag [#allocation4], 1
    %1849 = vsyncpa %s1848, 1
    %1850 = vsyncpa [#allocation10], 1
    %s1851 = scalar_lea.sflag [#allocation10], 1
    %1852 = vsyncpa %s1851, 1

</llo_original>
